<compile_context>
chip_gen: v7x
topology: tpu7x:2x2x1
jax: 0.10.0
libtpu: 0.0.40
codegen_flags: <defaults>
</compile_context>

<pallas_src>
import math
from functools import partial

import jax
import jax.numpy as jnp
from jax.experimental import pallas as pl
from jax.experimental.pallas import tpu as pltpu


# ---------------------------------------------------------------------------
# small helpers
# ---------------------------------------------------------------------------
def _round_up(x, m):
    return (x + m - 1) // m * m


def _pick_tile(M, cap=256):
    # Row-tile: multiple of 16 (bf16 sublane packing), and sized so that we get at
    # least 2 grid steps when M allows (pipelining + v7x megacore).
    return min(cap, _round_up(max(-(-M // 2), 16), 16))


# ---------------------------------------------------------------------------
# Pallas kernels
# ---------------------------------------------------------------------------
def _conv_pool_kernel(p_ref, w_ref, b_ref, o_ref, *, n_out_groups):
    """Fused conv(as matmul) + 2x2 maxpool + group-coset maxpool + bias + ReLU.

    p_ref : (4, tm, K)   bf16  -- 4 pool partners of an M-row block of im2col patches
    w_ref : (K, Ntot)    bf16  -- Ntot = n_out_groups * n_out (group copies folded into N)
    b_ref : (1, n_out)   f32
    o_ref : (tm, n_out)  f32
    """
    npart, tm, K = p_ref.shape
    Ntot = w_ref.shape[1]
    n_out = Ntot // n_out_groups

    # One MXU matmul for all partners & group copies: one RHS push, best cadence.
    p = p_ref[...].reshape(npart * tm, K)                 # collapse leading dim (tile-aligned)
    y = jnp.dot(p, w_ref[...], preferred_element_type=jnp.float32)   # (4*tm, Ntot) f32

    # 2x2 spatial max-pool: elementwise max over the 4 partner row-slabs (VPU).
    acc = y[0:tm]
    for part in range(1, npart):
        acc = jnp.maximum(acc, y[part * tm:(part + 1) * tm])

    # Group coset max-pool: max over the n_out-wide column slices (lane slices, XLU idle here).
    r = acc[:, 0:n_out]
    for g in range(1, n_out_groups):
        r = jnp.maximum(r, acc[:, g * n_out:(g + 1) * n_out])

    # Bias is uniform per max-set and ReLU is monotone, so bias+ReLU commute with the maxes.
    o_ref[...] = jnp.maximum(r + b_ref[...], 0.0).astype(o_ref.dtype)


def conv_relu_pool(parts, w, bias_row, *, n_out_groups):
    """parts: (4, M, K) f32; w: (K, n_out_groups*n_out) bf16; bias_row: (1, n_out) f32."""
    npart, M, K = parts.shape
    Ntot = w.shape[1]
    n_out = Ntot // n_out_groups

    tm = _pick_tile(M)
    M_pad = _round_up(M, tm)
    if M_pad != M:
        parts = jnp.pad(parts, ((0, 0), (0, M_pad - M), (0, 0)))
    parts = parts.astype(jnp.bfloat16)

    kernel = partial(_conv_pool_kernel, n_out_groups=n_out_groups)
    out = pl.pallas_call(
        kernel,
        grid=(M_pad // tm,),
        in_specs=[
            pl.BlockSpec((npart, tm, K), lambda i: (0, i, 0)),   # row block, all partners
            pl.BlockSpec((K, Ntot), lambda i: (0, 0)),           # weights resident across grid
            pl.BlockSpec((1, n_out), lambda i: (0, 0)),          # bias resident
        ],
        out_specs=pl.BlockSpec((tm, n_out), lambda i: (i, 0)),
        out_shape=jax.ShapeDtypeStruct((M_pad, n_out), jnp.float32),
        compiler_params=pltpu.CompilerParams(dimension_semantics=("parallel",)),
    )(parts, w, bias_row)
    return out[:M]


def _mlp_kernel(x_ref, w1_ref, b1_ref, w2_ref, b2_ref, o_ref):
    h = jnp.dot(x_ref[...], w1_ref[...], preferred_element_type=jnp.float32) + b1_ref[...]
    h = jnp.maximum(h, 0.0).astype(w2_ref.dtype)
    logits = jnp.dot(h, w2_ref[...], preferred_element_type=jnp.float32) + b2_ref[...]
    m = jnp.max(logits, axis=-1, keepdims=True)
    e = jnp.exp(logits - m)
    s = jnp.sum(e, axis=-1, keepdims=True)
    inv = pl.reciprocal(s, approx=True)       # EUP slot (idle here)
    inv = inv * (2.0 - s * inv)               # one Newton step -> ~f32 accuracy
    o_ref[...] = (e * inv).astype(o_ref.dtype)


def mlp_softmax(x, w1, b1, w2, b2):
    # TODO(synk): B=2 gives no useful row-parallelism; kept as a single grid step.
    B, D = x.shape
    H = w1.shape[1]
    C = w2.shape[1]
    x = x.astype(jnp.bfloat16)

    def full(shape):
        return pl.BlockSpec(shape, lambda i: (0,) * len(shape))

    return pl.pallas_call(
        _mlp_kernel,
        grid=(1,),
        in_specs=[full((B, D)), full((D, H)), full((1, H)), full((H, C)), full((1, C))],
        out_specs=full((B, C)),
        out_shape=jax.ShapeDtypeStruct((B, C), jnp.float32),
        compiler_params=pltpu.CompilerParams(dimension_semantics=("arbitrary",)),
    )(x, w1, b1, w2, b2)


# ---------------------------------------------------------------------------
# JAX glue: im2col with pool-partner stacking
# ---------------------------------------------------------------------------
def im2col_pool_partners(x_nhwc):
    """3x3 / pad=1 patches, the four 2x2-maxpool partners stacked on a leading axis.
    Returns (4, B*(H//2)*(W//2), 9*C); rows in (b, h', w') row-major order."""
    # TODO(synk): patches are still materialized in HBM (9x duplication); forming the 9
    # taps in-kernel from shifted slices of the activation would cut DMA bytes further.
    B, H, W, C = x_nhwc.shape
    xp = jnp.pad(x_nhwc, ((0, 0), (1, 1), (1, 1), (0, 0)))
    cols = jnp.stack([xp[:, kh:kh + H, kw:kw + W, :]
                      for kh in range(3) for kw in range(3)], axis=3)   # (B,H,W,9,C)
    patches = cols.reshape(B, H, W, 9 * C)
    parts = jnp.stack([patches[:, i::2, j::2, :].reshape(B * (H // 2) * (W // 2), 9 * C)
                       for i in range(2) for j in range(2)], axis=0)
    return parts


# ---------------------------------------------------------------------------
# Deterministic parameter construction (group-equivariant filter banks)
# ---------------------------------------------------------------------------
def hue_sat_matrix(gh, gs, nh, ns, sat_base=2.0):
    """RGB-channel transform: hue rotation about the gray axis + saturation scaling."""
    theta = 2.0 * math.pi * gh / max(nh, 1)
    c, s = math.cos(theta), math.sin(theta)
    u = 1.0 / math.sqrt(3.0)
    I = jnp.eye(3, dtype=jnp.float32)
    U = jnp.full((3, 3), 1.0 / 3.0, dtype=jnp.float32)
    ux = jnp.array([[0.0, -u, u], [u, 0.0, -u], [-u, u, 0.0]], dtype=jnp.float32)
    R = c * I + s * ux + (1.0 - c) * U
    scale = sat_base ** (gs - (ns - 1) / 2.0) if ns > 1 else 1.0
    S = scale * I + (1.0 - scale) * U
    return S @ R


def init_params(key, num_classes, nh, ns):
    G = nh * ns
    k = jax.random.split(key, 8)
    W1 = jax.random.normal(k[0], (3, 3, 3, 32), jnp.float32) / math.sqrt(3 * 9)
    b1 = jax.random.normal(k[1], (32,), jnp.float32) * 0.01
    W2 = jax.random.normal(k[2], (3, 3, G, 32, 64), jnp.float32) / math.sqrt(G * 32 * 9)
    b2 = jax.random.normal(k[3], (64,), jnp.float32) * 0.01
    Wfc1 = jax.random.normal(k[4], (64 * 7 * 7, 128), jnp.float32) / math.sqrt(64 * 7 * 7)
    bfc1 = jax.random.normal(k[5], (128,), jnp.float32) * 0.01
    Wfc2 = jax.random.normal(k[6], (128, num_classes), jnp.float32) / math.sqrt(128)
    bfc2 = jax.random.normal(k[7], (num_classes,), jnp.float32) * 0.01

    # Lifting conv: one transformed copy of the RGB filters per group element,
    # folded into the output-channel dim (column = g*32 + c_out).
    # TODO(synk): exact hsgconv.GroupConvHS filter transform unavailable; using a hue
    # rotation about the gray axis combined with saturation scaling as the group action.
    W1_groups = []
    for gh in range(nh):
        for gs in range(ns):
            T = hue_sat_matrix(gh, gs, nh, ns)
            W1_groups.append(jnp.einsum('ij,khjo->khio', T, W1))
    W1_all = jnp.concatenate(W1_groups, axis=-1).reshape(9 * 3, G * 32)   # (27, G*32)
    b1_row = jnp.tile(b1, G)[None, :]                                      # (1, G*32)

    # Group conv over the (hue x saturation) product group; all G output-group copies
    # folded into the N dim (column = g_out*64 + c_out) so conv2 is ONE matmul.
    # TODO(synk): saturation axis treated cyclically; hsgconv may clip at the edges.
    def rel_index(g_out, g_in):
        gh_o, gs_o = divmod(g_out, ns)
        gh_i, gs_i = divmod(g_in, ns)
        return ((gh_i - gh_o) % nh) * ns + ((gs_i - gs_o) % ns)

    W2_cols = []
    for g_out in range(G):
        wg = jnp.concatenate([W2[:, :, rel_index(g_out, g_in)] for g_in in range(G)], axis=2)
        W2_cols.append(wg.reshape(9 * G * 32, 64))
    W2_all = jnp.concatenate(W2_cols, axis=-1)                             # (9*G*32, G*64)
    b2_row = b2[None, :]                                                   # (1, 64)

    # Fold PyTorch's NCHW flatten order into fc1's rows: feat is (h, w, c)-major after
    # conv2, Wfc1 rows are (c, h, w)-major -> permute once here, no runtime transpose.
    Wfc1_perm = Wfc1.reshape(64, 7, 7, 128).transpose(1, 2, 0, 3).reshape(64 * 7 * 7, 128)

    return dict(W1=W1_all.astype(jnp.bfloat16), b1=b1_row,
                W2=W2_all.astype(jnp.bfloat16), b2=b2_row,
                Wfc1=Wfc1_perm.astype(jnp.bfloat16), bfc1=bfc1[None, :],
                Wfc2=Wfc2.astype(jnp.bfloat16), bfc2=bfc2[None, :])


# ---------------------------------------------------------------------------
# Forward pass (mirrors the nn.Sequential in SimpleNetwork)
# ---------------------------------------------------------------------------
def simple_network_forward(x_nchw, params, nh, ns):
    G = nh * ns
    B = x_nchw.shape[0]
    x = jnp.transpose(x_nchw, (0, 2, 3, 1)).astype(jnp.float32)   # NCHW -> NHWC
    H, W = x.shape[1], x.shape[2]

    # conv_1 (lifting group conv) -> ReLU -> MaxPool2d(2,2)
    p = im2col_pool_partners(x)                                          # (4, B*14*14, 27)
    y1 = conv_relu_pool(p, params['W1'], params['b1'], n_out_groups=1)   # (B*14*14, G*32)
    y1 = y1.reshape(B, H // 2, W // 2, G * 32)

    # conv_2 (group conv) -> ReLU -> MaxPool2d(2,2) -> GroupPool (coset max)
    p = im2col_pool_partners(y1)                                         # (4, B*7*7, 9*G*32)
    y2 = conv_relu_pool(p, params['W2'], params['b2'], n_out_groups=G)   # (B*7*7, 64)

    # Flatten (NCHW order is pre-folded into Wfc1), fc1 -> ReLU -> fc2 -> Softmax(dim=1)
    feat = y2.reshape(B, (H // 4) * (W // 4) * 64)
    return mlp_softmax(feat, params['Wfc1'], params['bfc1'],
                       params['Wfc2'], params['bfc2'])


if __name__ == "__main__":
    num_classes, n_groups_hue, n_groups_saturation = 10, 3, 1
    key = jax.random.PRNGKey(0)
    kx, kp = jax.random.split(key)

    # Input must be 28x28 so that 64*7*7 matches fc1 after two 2x2 pools.
    x = jax.random.normal(kx, (2, 3, 28, 28), jnp.float32)        # NCHW, like PyTorch
    params = init_params(kp, num_classes, n_groups_hue, n_groups_saturation)

    out = simple_network_forward(x, params, n_groups_hue, n_groups_saturation)
    out = jax.block_until_ready(out)

    assert out.shape == (2, num_classes)
    assert bool(jnp.all(jnp.isfinite(out)))
    assert bool(jnp.allclose(jnp.sum(out, axis=-1), 1.0, atol=1e-4))
    print("KERNEL_OK")
</pallas_src>

<mosaic_0001>
module attributes {stable_mosaic.version = 11 : i64} {
  func.func @_conv_pool_kernel(%arg0: i32, %arg1: memref<4x208x27xbf16, #tpu.memory_space<vmem>>, %arg2: memref<27x96xbf16, #tpu.memory_space<vmem>>, %arg3: memref<1x96xf32, #tpu.memory_space<vmem>>, %arg4: memref<208x96xf32, #tpu.memory_space<vmem>>) attributes {dimension_semantics = [#tpu.dimension_semantics<parallel>], iteration_bounds = array<i64: 2>, scalar_prefetch = 0 : i64, scratch_operands = 0 : i64, tpu.core_type = #tpu.core_type<tc>, window_params = [{transform_indices = @transform_0, window_bounds = array<i64: 4, 208, 27>}, {pipeline_mode = #tpu.pipeline_mode<synchronous>, transform_indices = @transform_1, window_bounds = array<i64: 27, 96>}, {pipeline_mode = #tpu.pipeline_mode<synchronous>, transform_indices = @transform_2, window_bounds = array<i64: 1, 96>}, {transform_indices = @transform_3, window_bounds = array<i64: 208, 96>}]} {
    %c0 = arith.constant 0 : index
    %c0_0 = arith.constant 0 : index
    %c0_1 = arith.constant 0 : index
    %0 = vector.load %arg1[%c0, %c0_0, %c0_1] : memref<4x208x27xbf16, #tpu.memory_space<vmem>>, vector<4x208x27xbf16>
    %1 = vector.shape_cast %0 : vector<4x208x27xbf16> to vector<832x27xbf16>
    %c0_2 = arith.constant 0 : index
    %c0_3 = arith.constant 0 : index
    %2 = vector.load %arg2[%c0_2, %c0_3] : memref<27x96xbf16, #tpu.memory_space<vmem>>, vector<27x96xbf16>
    %cst = arith.constant dense<0.000000e+00> : vector<832x96xf32>
    %3 = tpu.matmul %1, %2, %cst {dimension_numbers = #tpu.dot_dimension_numbers<[1], [0], [0], [1], [0, 0, 1, 1], [], []>} : vector<832x27xbf16>, vector<27x96xbf16>, vector<832x96xf32> -> vector<832x96xf32>
    %4 = vector.extract_strided_slice %3 {offsets = [0, 0], sizes = [208, 96], strides = [1, 1]} : vector<832x96xf32> to vector<208x96xf32>
    %5 = vector.extract_strided_slice %3 {offsets = [208, 0], sizes = [208, 96], strides = [1, 1]} : vector<832x96xf32> to vector<208x96xf32>
    %6 = arith.maximumf %4, %5 : vector<208x96xf32>
    %7 = vector.extract_strided_slice %3 {offsets = [416, 0], sizes = [208, 96], strides = [1, 1]} : vector<832x96xf32> to vector<208x96xf32>
    %8 = arith.maximumf %6, %7 : vector<208x96xf32>
    %9 = vector.extract_strided_slice %3 {offsets = [624, 0], sizes = [208, 96], strides = [1, 1]} : vector<832x96xf32> to vector<208x96xf32>
    %10 = arith.maximumf %8, %9 : vector<208x96xf32>
    %c0_4 = arith.constant 0 : index
    %c0_5 = arith.constant 0 : index
    %11 = vector.load %arg3[%c0_4, %c0_5] : memref<1x96xf32, #tpu.memory_space<vmem>>, vector<1x96xf32>
    %12 = vector.broadcast %11 : vector<1x96xf32> to vector<208x96xf32>
    %13 = arith.addf %10, %12 : vector<208x96xf32>
    %cst_6 = arith.constant 0.000000e+00 : f32
    %14 = vector.broadcast %cst_6 : f32 to vector<208x96xf32>
    %15 = arith.maximumf %13, %14 : vector<208x96xf32>
    %c0_7 = arith.constant 0 : index
    %c0_8 = arith.constant 0 : index
    %16 = vector.load %arg4[%c0_7, %c0_8] : memref<208x96xf32, #tpu.memory_space<vmem>>, vector<208x96xf32>
    tpu.vector_store %arg4[%c0_7, %c0_8], %15 {strides = array<i32>} : memref<208x96xf32, #tpu.memory_space<vmem>>, vector<208x96xf32>,
    return
  }
  func.func @transform_0(%arg0: i32) -> (i32, i32, i32) {
    %c0_i32 = arith.constant 0 : i32
    %c0_i32_0 = arith.constant 0 : i32
    %c0_i32_1 = arith.constant 0 : i32
    return %c0_i32, %arg0, %c0_i32_0 : i32, i32, i32
  }
  func.func @transform_1(%arg0: i32) -> (i32, i32) {
    %c0_i32 = arith.constant 0 : i32
    %c0_i32_0 = arith.constant 0 : i32
    %c0_i32_1 = arith.constant 0 : i32
    return %c0_i32, %c0_i32_0 : i32, i32
  }
  func.func @transform_2(%arg0: i32) -> (i32, i32) {
    %c0_i32 = arith.constant 0 : i32
    %c0_i32_0 = arith.constant 0 : i32
    %c0_i32_1 = arith.constant 0 : i32
    return %c0_i32, %c0_i32_0 : i32, i32
  }
  func.func @transform_3(%arg0: i32) -> (i32, i32) {
    %c0_i32 = arith.constant 0 : i32
    %c0_i32_0 = arith.constant 0 : i32
    return %arg0, %c0_i32 : i32, i32
  }
}

</mosaic_0001>

<llo_original>
// kernel: tpu_custom_call.1
$region0: #{tpu_custom_call.1}
  #allocation0 [shape = 'u32[]', space=smem, size = 0x4, offset = 0x4, fixed_abs, tag = 'smem constant byte address 0x4 - core index']
  #allocation1 [shape = 'u32[144,128]{1,0:T(1,128)}', space=vmem, size = 0x12000, scoped, tag = 'internal scratch']
  %s0 = inlined_call_operand.vmem [shape: bf16[4,416,27], index: 0, kind: input, shape index: {}]
  %s1 = inlined_call_operand.vmem [shape: bf16[27,96], index: 1, kind: input, shape index: {}]
  %s2 = inlined_call_operand.vmem [shape: f32[1,96], index: 2, kind: input, shape index: {}]
  %s3 = inlined_call_operand.vmem [shape: f32[416,96], index: 3, kind: output, shape index: {}]
  %s4 = sld [smem:[#allocation0]]
  $region86: #{tpu_custom_call.1} parent=0
    _
  %s6 = ssub.s32 1, %s4
  %s7 = scalar_select 0, %s6, %s4
  $region1: #{tpu_custom_call.1} parent=0
    #allocation2 [shape = 'u8[425984]{0}', space=vmem, size = 0x68000, scoped, tag = 'input window, operand 0']
    loop: start=0, step=1, limit=4
    $region2: #{tpu_custom_call.1} parent=1 // loop_pre_header
      _
    $region3: #{tpu_custom_call.1} parent=1 // loop_header
      %s9 = sphi 0, %s13
      %p10 = scmp.ge.s32.totalorder %s9, 4
      %s19 = sphi 0, %s21
      %s22 = sphi 0, %s19
      %s23 = sphi 0, %s22
      %s39 = sphi 0, %s23
      %s43 = sphi 0, %s43
      %s45 = sphi 0, %s43
      %s46 = sphi 0, %s45
      %s60 = sphi 0, %s46
      %s64 = sphi 0, %s64
      %s66 = sphi 0, %s64
      %s67 = sphi 0, %s66
      %s81 = sphi 0, %s67
      %s87 = sphi 0, %s89
      %s90 = sphi 0, %s87
      %s91 = sphi 0, %s90
      %s107 = sphi 0, %s91
    $region4: #{tpu_custom_call.1} parent=1 // loop_header_branch
      %12 = sbr.rel (%p10) target = $region8
    $region5: #{tpu_custom_call.1} parent=1 // loop_body
      %s14 = ssub.s32 %s9, 1
      %s15 = ssub.s32 %s9, 2
      %s16 = sadd.s32 %s9, 1
      %s17 = ssub.s32 %s9, %s16
      %p18 = scmp.eq.s32.totalorder %s17, 0
      %s20 = sadd.s32 %s19, 1
      %s21 = scalar_select %p18, %s19, %s20
      %p24 = pneg %p18
      %p25 = scmp.eq.s32.totalorder %s9, 1
      %p26 = por %p24, %p25
      %p27 = scmp.ne.s32.totalorder %s19, %s22
      %p28 = scmp.eq.s32.totalorder %s9, 0
      %p29 = por %p27, %p28
      %p30 = scmp.ne.s32.totalorder %s19, %s22
      %p31 = scmp.eq.s32.totalorder %s14, 1
      %p32 = por %p30, %p31
      %p33 = scmp.ne.s32.totalorder %s22, %s23
      %p34 = scmp.eq.s32.totalorder %s14, 0
      %p35 = por %p33, %p34
      %p36 = scmp.ne.s32.totalorder %s22, %s23
      %p37 = scmp.eq.s32.totalorder %s15, 1
      %p38 = por %p36, %p37
      %p40 = scmp.ne.s32.totalorder %s23, %s39
      %p41 = scmp.eq.s32.totalorder %s15, 0
      %p42 = por %p40, %p41
      %s44 = sadd.s32 %s43, 1
      %p47 = scmp.eq.s32.totalorder %s9, 1
      %p48 = scmp.ne.s32.totalorder %s43, %s45
      %p49 = scmp.eq.s32.totalorder %s9, 0
      %p50 = por %p48, %p49
      %p51 = scmp.ne.s32.totalorder %s43, %s45
      %p52 = scmp.eq.s32.totalorder %s14, 1
      %p53 = por %p51, %p52
      %p54 = scmp.ne.s32.totalorder %s45, %s46
      %p55 = scmp.eq.s32.totalorder %s14, 0
      %p56 = por %p54, %p55
      %p57 = scmp.ne.s32.totalorder %s45, %s46
      %p58 = scmp.eq.s32.totalorder %s15, 1
      %p59 = por %p57, %p58
      %p61 = scmp.ne.s32.totalorder %s46, %s60
      %p62 = scmp.eq.s32.totalorder %s15, 0
      %p63 = por %p61, %p62
      %s65 = sadd.s32 %s64, 1
      %p68 = scmp.eq.s32.totalorder %s9, 1
      %p69 = scmp.ne.s32.totalorder %s64, %s66
      %p70 = scmp.eq.s32.totalorder %s9, 0
      %p71 = por %p69, %p70
      %p72 = scmp.ne.s32.totalorder %s64, %s66
      %p73 = scmp.eq.s32.totalorder %s14, 1
      %p74 = por %p72, %p73
      %p75 = scmp.ne.s32.totalorder %s66, %s67
      %p76 = scmp.eq.s32.totalorder %s14, 0
      %p77 = por %p75, %p76
      %p78 = scmp.ne.s32.totalorder %s66, %s67
      %p79 = scmp.eq.s32.totalorder %s15, 1
      %p80 = por %p78, %p79
      %p82 = scmp.ne.s32.totalorder %s67, %s81
      %p83 = scmp.eq.s32.totalorder %s15, 0
      %p84 = por %p82, %p83
      %s85 = ssub.s32 %s9, %s16
      %p86 = scmp.eq.s32.totalorder %s85, 0
      %s88 = sadd.s32 %s87, 1
      %s89 = scalar_select %p86, %s87, %s88
      %p92 = pneg %p86
      %p93 = scmp.eq.s32.totalorder %s9, 1
      %p94 = por %p92, %p93
      %p95 = scmp.ne.s32.totalorder %s87, %s90
      %p96 = scmp.eq.s32.totalorder %s9, 0
      %p97 = por %p95, %p96
      %p98 = scmp.ne.s32.totalorder %s87, %s90
      %p99 = scmp.eq.s32.totalorder %s14, 1
      %p100 = por %p98, %p99
      %p101 = scmp.ne.s32.totalorder %s90, %s91
      %p102 = scmp.eq.s32.totalorder %s14, 0
      %p103 = por %p101, %p102
      %p104 = scmp.ne.s32.totalorder %s90, %s91
      %p105 = scmp.eq.s32.totalorder %s15, 1
      %p106 = por %p104, %p105
      %p108 = scmp.ne.s32.totalorder %s91, %s107
      %p109 = scmp.eq.s32.totalorder %s15, 0
      %p110 = por %p108, %p109
      %p111 = scmp.le.s32.totalorder 1, %s9
      %p112 = scmp.lt.s32.totalorder %s9, 3
      %p113 = pnand %p111, %p112
      %p114 = pneg %p113
      // Predicated region
      $region9: #{tpu_custom_call.1} parent=5 // pred_check
        _
      $region10: #{tpu_custom_call.1} parent=5 // pred_check_branch
        %116 = sbr.rel (%p113) target = $region12
      $region11: #{tpu_custom_call.1} parent=5 // pred_region
        %s117 = ssub.s32 %s9, 1
        // Predicated region
        $region13: #{tpu_custom_call.1} parent=11 // pred_check
          %p118 = pneg %p56
        $region14: #{tpu_custom_call.1} parent=11 // pred_check_branch
          %120 = sbr.rel (%p118) target = $region16
        $region15: #{tpu_custom_call.1} parent=11 // pred_region
          _
        $region16: #{tpu_custom_call.1} parent=11 // pred_fallthru
          _
        // Predicated region
        $region17: #{tpu_custom_call.1} parent=11 // pred_check
          %p121 = pneg %p77
        $region18: #{tpu_custom_call.1} parent=11 // pred_check_branch
          %123 = sbr.rel (%p121) target = $region20
        $region19: #{tpu_custom_call.1} parent=11 // pred_region
          _
        $region20: #{tpu_custom_call.1} parent=11 // pred_fallthru
          _
      $region12: #{tpu_custom_call.1} parent=5 // pred_fallthru
        _
      %p124 = scmp.lt.s32.totalorder %s9, 2
      // Predicated region
      $region21: #{tpu_custom_call.1} parent=5 // pred_check
        %p125 = pneg %p124
      $region22: #{tpu_custom_call.1} parent=5 // pred_check_branch
        %127 = sbr.rel (%p125) target = $region24
      $region23: #{tpu_custom_call.1} parent=5 // pred_region
        // Predicated region
        $region25: #{tpu_custom_call.1} parent=23 // pred_check
          %p128 = pneg %p29
        $region26: #{tpu_custom_call.1} parent=23 // pred_check_branch
          %130 = sbr.rel (%p128) target = $region28
        $region27: #{tpu_custom_call.1} parent=23 // pred_region
          %s131 = sand.u32 %s19, 1
          %s132 = sand.u32 %s19, 1
          %s133 = smul.addr %s132, 416
          %s134 = scalar_lea.vmem [#allocation2], %s133
          %s135 = smul.u32 26, %s9
          %s136 = smul.addr %s135, 4
          %s137 = scalar_lea.vmem %s0, %s136
          // Predicated region
          $region29: #{tpu_custom_call.1} parent=27 // pred_check
            _
          $region30: #{tpu_custom_call.1} parent=27 // pred_check_branch
            %139 = sbr.rel (0) target = $region32
          $region31: #{tpu_custom_call.1} parent=27 // pred_region
            // Predicated region
            $region33: #{tpu_custom_call.1} parent=31 // pred_check
              _
            $region34: #{tpu_custom_call.1} parent=31 // pred_check_branch
              %141 = sbr.rel target = $region36
            $region35: #{tpu_custom_call.1} parent=31 // pred_region
              // Predicated region
              $region48: #{tpu_custom_call.1} parent=35 // pred_check
                _
              $region49: #{tpu_custom_call.1} parent=35 // pred_check_branch
                %362 = sbr.rel (0) target = $region51
              $region50: #{tpu_custom_call.1} parent=35 // pred_region
                loop: start=0, step=1, limit=1
                $region52: #{tpu_custom_call.1} parent=50 // loop_pre_header
                  _
                $region53: #{tpu_custom_call.1} parent=50 // loop_header
                  %s364 = sphi 0, %s368
                  %p365 = scmp.ge.s32.totalorder %s364, 1
                  %s369 = sphi %s137, %s137
                  %s370 = sphi %s134, %s134
                $region54: #{tpu_custom_call.1} parent=50 // loop_header_branch
                  %367 = sbr.rel (%p365) target = $region58
                $region55: #{tpu_custom_call.1} parent=50 // loop_body
                  _
                $region56: #{tpu_custom_call.1} parent=50 // loop_footer
                  %s368 = sadd.s32 1, %s364
                $region57: #{tpu_custom_call.1} parent=50 // loop_footer_branch
                  %363 = sbr.rel target = $region53
                $region58: #{tpu_custom_call.1} parent=50 // loop_exit
                  _
                loop: start=0, step=1, limit=1
                $region59: #{tpu_custom_call.1} parent=50 // loop_pre_header
                  _
                $region60: #{tpu_custom_call.1} parent=50 // loop_header
                  %s373 = sphi 0, %s377
                  %p374 = scmp.ge.s32.totalorder %s373, 1
                  %s378 = sphi %s137, %s137
                  %s379 = sphi %s134, %s134
                $region61: #{tpu_custom_call.1} parent=50 // loop_header_branch
                  %376 = sbr.rel (%p374) target = $region65
                $region62: #{tpu_custom_call.1} parent=50 // loop_body
                  %v380 = vld [vmem:[%s378] sm:$0xf]
                  %381 = vst [vmem:[%s379] sm:$0xf] %v380
                  %v382 = vld [vmem:[%s378 + $0x4] sm:$0xf]
                  %383 = vst [vmem:[%s379 + $0x4] sm:$0xf] %v382
                  %v384 = vld [vmem:[%s378 + $0x8] sm:$0xf]
                  %385 = vst [vmem:[%s379 + $0x8] sm:$0xf] %v384
                  %v386 = vld [vmem:[%s378 + $0xc] sm:$0xf]
                  %387 = vst [vmem:[%s379 + $0xc] sm:$0xf] %v386
                  %v388 = vld [vmem:[%s378 + $0x10] sm:$0xf]
                  %389 = vst [vmem:[%s379 + $0x10] sm:$0xf] %v388
                  %v390 = vld [vmem:[%s378 + $0x14] sm:$0xf]
                  %391 = vst [vmem:[%s379 + $0x14] sm:$0xf] %v390
                  %v392 = vld [vmem:[%s378 + $0x18] sm:$0xf]
                  %393 = vst [vmem:[%s379 + $0x18] sm:$0xf] %v392
                  %v394 = vld [vmem:[%s378 + $0x1c] sm:$0xf]
                  %395 = vst [vmem:[%s379 + $0x1c] sm:$0xf] %v394
                  %v396 = vld [vmem:[%s378 + $0x20] sm:$0xf]
                  %397 = vst [vmem:[%s379 + $0x20] sm:$0xf] %v396
                  %v398 = vld [vmem:[%s378 + $0x24] sm:$0xf]
                  %399 = vst [vmem:[%s379 + $0x24] sm:$0xf] %v398
                  %v400 = vld [vmem:[%s378 + $0x28] sm:$0xf]
                  %401 = vst [vmem:[%s379 + $0x28] sm:$0xf] %v400
                  %v402 = vld [vmem:[%s378 + $0x2c] sm:$0xf]
                  %403 = vst [vmem:[%s379 + $0x2c] sm:$0xf] %v402
                  %v404 = vld [vmem:[%s378 + $0x30] sm:$0xf]
                  %405 = vst [vmem:[%s379 + $0x30] sm:$0xf] %v404
                  %v406 = vld [vmem:[%s378 + $0x34] sm:$0xf]
                  %407 = vst [vmem:[%s379 + $0x34] sm:$0xf] %v406
                  %v408 = vld [vmem:[%s378 + $0x38] sm:$0xf]
                  %409 = vst [vmem:[%s379 + $0x38] sm:$0xf] %v408
                  %v410 = vld [vmem:[%s378 + $0x3c] sm:$0xf]
                  %411 = vst [vmem:[%s379 + $0x3c] sm:$0xf] %v410
                  %v412 = vld [vmem:[%s378 + $0x40] sm:$0xf]
                  %413 = vst [vmem:[%s379 + $0x40] sm:$0xf] %v412
                  %v414 = vld [vmem:[%s378 + $0x44] sm:$0xf]
                  %415 = vst [vmem:[%s379 + $0x44] sm:$0xf] %v414
                  %v416 = vld [vmem:[%s378 + $0x48] sm:$0xf]
                  %417 = vst [vmem:[%s379 + $0x48] sm:$0xf] %v416
                  %v418 = vld [vmem:[%s378 + $0x4c] sm:$0xf]
                  %419 = vst [vmem:[%s379 + $0x4c] sm:$0xf] %v418
                  %v420 = vld [vmem:[%s378 + $0x50] sm:$0xf]
                  %421 = vst [vmem:[%s379 + $0x50] sm:$0xf] %v420
                  %v422 = vld [vmem:[%s378 + $0x54] sm:$0xf]
                  %423 = vst [vmem:[%s379 + $0x54] sm:$0xf] %v422
                  %v424 = vld [vmem:[%s378 + $0x58] sm:$0xf]
                  %425 = vst [vmem:[%s379 + $0x58] sm:$0xf] %v424
                  %v426 = vld [vmem:[%s378 + $0x5c] sm:$0xf]
                  %427 = vst [vmem:[%s379 + $0x5c] sm:$0xf] %v426
                  %v428 = vld [vmem:[%s378 + $0x60] sm:$0xf]
                  %429 = vst [vmem:[%s379 + $0x60] sm:$0xf] %v428
                  %v430 = vld [vmem:[%s378 + $0x64] sm:$0xf]
                  %431 = vst [vmem:[%s379 + $0x64] sm:$0xf] %v430
                  %v432 = vld [vmem:[%s378 + $0xd0] sm:$0xf]
                  %433 = vst [vmem:[%s379 + $0x68] sm:$0xf] %v432
                  %v434 = vld [vmem:[%s378 + $0xd4] sm:$0xf]
                  %435 = vst [vmem:[%s379 + $0x6c] sm:$0xf] %v434
                  %v436 = vld [vmem:[%s378 + $0xd8] sm:$0xf]
                  %437 = vst [vmem:[%s379 + $0x70] sm:$0xf] %v436
                  %v438 = vld [vmem:[%s378 + $0xdc] sm:$0xf]
                  %439 = vst [vmem:[%s379 + $0x74] sm:$0xf] %v438
                  %v440 = vld [vmem:[%s378 + $0xe0] sm:$0xf]
                  %441 = vst [vmem:[%s379 + $0x78] sm:$0xf] %v440
                  %v442 = vld [vmem:[%s378 + $0xe4] sm:$0xf]
                  %443 = vst [vmem:[%s379 + $0x7c] sm:$0xf] %v442
                  %v444 = vld [vmem:[%s378 + $0xe8] sm:$0xf]
                  %445 = vst [vmem:[%s379 + $0x80] sm:$0xf] %v444
                  %v446 = vld [vmem:[%s378 + $0xec] sm:$0xf]
                  %447 = vst [vmem:[%s379 + $0x84] sm:$0xf] %v446
                  %v448 = vld [vmem:[%s378 + $0xf0] sm:$0xf]
                  %449 = vst [vmem:[%s379 + $0x88] sm:$0xf] %v448
                  %v450 = vld [vmem:[%s378 + $0xf4] sm:$0xf]
                  %451 = vst [vmem:[%s379 + $0x8c] sm:$0xf] %v450
                  %v452 = vld [vmem:[%s378 + $0xf8] sm:$0xf]
                  %453 = vst [vmem:[%s379 + $0x90] sm:$0xf] %v452
                  %v454 = vld [vmem:[%s378 + $0xfc] sm:$0xf]
                  %455 = vst [vmem:[%s379 + $0x94] sm:$0xf] %v454
                  %v456 = vld [vmem:[%s378 + $0x100] sm:$0xf]
                  %457 = vst [vmem:[%s379 + $0x98] sm:$0xf] %v456
                  %v458 = vld [vmem:[%s378 + $0x104] sm:$0xf]
                  %459 = vst [vmem:[%s379 + $0x9c] sm:$0xf] %v458
                  %v460 = vld [vmem:[%s378 + $0x108] sm:$0xf]
                  %461 = vst [vmem:[%s379 + $0xa0] sm:$0xf] %v460
                  %v462 = vld [vmem:[%s378 + $0x10c] sm:$0xf]
                  %463 = vst [vmem:[%s379 + $0xa4] sm:$0xf] %v462
                  %v464 = vld [vmem:[%s378 + $0x110] sm:$0xf]
                  %465 = vst [vmem:[%s379 + $0xa8] sm:$0xf] %v464
                  %v466 = vld [vmem:[%s378 + $0x114] sm:$0xf]
                  %467 = vst [vmem:[%s379 + $0xac] sm:$0xf] %v466
                  %v468 = vld [vmem:[%s378 + $0x118] sm:$0xf]
                  %469 = vst [vmem:[%s379 + $0xb0] sm:$0xf] %v468
                  %v470 = vld [vmem:[%s378 + $0x11c] sm:$0xf]
                  %471 = vst [vmem:[%s379 + $0xb4] sm:$0xf] %v470
                  %v472 = vld [vmem:[%s378 + $0x120] sm:$0xf]
                  %473 = vst [vmem:[%s379 + $0xb8] sm:$0xf] %v472
                  %v474 = vld [vmem:[%s378 + $0x124] sm:$0xf]
                  %475 = vst [vmem:[%s379 + $0xbc] sm:$0xf] %v474
                  %v476 = vld [vmem:[%s378 + $0x128] sm:$0xf]
                  %477 = vst [vmem:[%s379 + $0xc0] sm:$0xf] %v476
                  %v478 = vld [vmem:[%s378 + $0x12c] sm:$0xf]
                  %479 = vst [vmem:[%s379 + $0xc4] sm:$0xf] %v478
                  %v480 = vld [vmem:[%s378 + $0x130] sm:$0xf]
                  %481 = vst [vmem:[%s379 + $0xc8] sm:$0xf] %v480
                  %v482 = vld [vmem:[%s378 + $0x134] sm:$0xf]
                  %483 = vst [vmem:[%s379 + $0xcc] sm:$0xf] %v482
                  %v484 = vld [vmem:[%s378 + $0x1a0] sm:$0xf]
                  %485 = vst [vmem:[%s379 + $0xd0] sm:$0xf] %v484
                  %v486 = vld [vmem:[%s378 + $0x1a4] sm:$0xf]
                  %487 = vst [vmem:[%s379 + $0xd4] sm:$0xf] %v486
                  %v488 = vld [vmem:[%s378 + $0x1a8] sm:$0xf]
                  %489 = vst [vmem:[%s379 + $0xd8] sm:$0xf] %v488
                  %v490 = vld [vmem:[%s378 + $0x1ac] sm:$0xf]
                  %491 = vst [vmem:[%s379 + $0xdc] sm:$0xf] %v490
                  %v492 = vld [vmem:[%s378 + $0x1b0] sm:$0xf]
                  %493 = vst [vmem:[%s379 + $0xe0] sm:$0xf] %v492
                  %v494 = vld [vmem:[%s378 + $0x1b4] sm:$0xf]
                  %495 = vst [vmem:[%s379 + $0xe4] sm:$0xf] %v494
                  %v496 = vld [vmem:[%s378 + $0x1b8] sm:$0xf]
                  %497 = vst [vmem:[%s379 + $0xe8] sm:$0xf] %v496
                  %v498 = vld [vmem:[%s378 + $0x1bc] sm:$0xf]
                  %499 = vst [vmem:[%s379 + $0xec] sm:$0xf] %v498
                  %v500 = vld [vmem:[%s378 + $0x1c0] sm:$0xf]
                  %501 = vst [vmem:[%s379 + $0xf0] sm:$0xf] %v500
                  %v502 = vld [vmem:[%s378 + $0x1c4] sm:$0xf]
                  %503 = vst [vmem:[%s379 + $0xf4] sm:$0xf] %v502
                  %v504 = vld [vmem:[%s378 + $0x1c8] sm:$0xf]
                  %505 = vst [vmem:[%s379 + $0xf8] sm:$0xf] %v504
                  %v506 = vld [vmem:[%s378 + $0x1cc] sm:$0xf]
                  %507 = vst [vmem:[%s379 + $0xfc] sm:$0xf] %v506
                  %v508 = vld [vmem:[%s378 + $0x1d0] sm:$0xf]
                  %509 = vst [vmem:[%s379 + $0x100] sm:$0xf] %v508
                  %v510 = vld [vmem:[%s378 + $0x1d4] sm:$0xf]
                  %511 = vst [vmem:[%s379 + $0x104] sm:$0xf] %v510
                  %v512 = vld [vmem:[%s378 + $0x1d8] sm:$0xf]
                  %513 = vst [vmem:[%s379 + $0x108] sm:$0xf] %v512
                  %v514 = vld [vmem:[%s378 + $0x1dc] sm:$0xf]
                  %515 = vst [vmem:[%s379 + $0x10c] sm:$0xf] %v514
                  %v516 = vld [vmem:[%s378 + $0x1e0] sm:$0xf]
                  %517 = vst [vmem:[%s379 + $0x110] sm:$0xf] %v516
                  %v518 = vld [vmem:[%s378 + $0x1e4] sm:$0xf]
                  %519 = vst [vmem:[%s379 + $0x114] sm:$0xf] %v518
                  %v520 = vld [vmem:[%s378 + $0x1e8] sm:$0xf]
                  %521 = vst [vmem:[%s379 + $0x118] sm:$0xf] %v520
                  %v522 = vld [vmem:[%s378 + $0x1ec] sm:$0xf]
                  %523 = vst [vmem:[%s379 + $0x11c] sm:$0xf] %v522
                  %v524 = vld [vmem:[%s378 + $0x1f0] sm:$0xf]
                  %525 = vst [vmem:[%s379 + $0x120] sm:$0xf] %v524
                  %v526 = vld [vmem:[%s378 + $0x1f4] sm:$0xf]
                  %527 = vst [vmem:[%s379 + $0x124] sm:$0xf] %v526
                  %v528 = vld [vmem:[%s378 + $0x1f8] sm:$0xf]
                  %529 = vst [vmem:[%s379 + $0x128] sm:$0xf] %v528
                  %v530 = vld [vmem:[%s378 + $0x1fc] sm:$0xf]
                  %531 = vst [vmem:[%s379 + $0x12c] sm:$0xf] %v530
                  %v532 = vld [vmem:[%s378 + $0x200] sm:$0xf]
                  %533 = vst [vmem:[%s379 + $0x130] sm:$0xf] %v532
                  %v534 = vld [vmem:[%s378 + $0x204] sm:$0xf]
                  %535 = vst [vmem:[%s379 + $0x134] sm:$0xf] %v534
                  %v536 = vld [vmem:[%s378 + $0x270] sm:$0xf]
                  %537 = vst [vmem:[%s379 + $0x138] sm:$0xf] %v536
                  %v538 = vld [vmem:[%s378 + $0x274] sm:$0xf]
                  %539 = vst [vmem:[%s379 + $0x13c] sm:$0xf] %v538
                  %v540 = vld [vmem:[%s378 + $0x278] sm:$0xf]
                  %541 = vst [vmem:[%s379 + $0x140] sm:$0xf] %v540
                  %v542 = vld [vmem:[%s378 + $0x27c] sm:$0xf]
                  %543 = vst [vmem:[%s379 + $0x144] sm:$0xf] %v542
                  %v544 = vld [vmem:[%s378 + $0x280] sm:$0xf]
                  %545 = vst [vmem:[%s379 + $0x148] sm:$0xf] %v544
                  %v546 = vld [vmem:[%s378 + $0x284] sm:$0xf]
                  %547 = vst [vmem:[%s379 + $0x14c] sm:$0xf] %v546
                  %v548 = vld [vmem:[%s378 + $0x288] sm:$0xf]
                  %549 = vst [vmem:[%s379 + $0x150] sm:$0xf] %v548
                  %v550 = vld [vmem:[%s378 + $0x28c] sm:$0xf]
                  %551 = vst [vmem:[%s379 + $0x154] sm:$0xf] %v550
                  %v552 = vld [vmem:[%s378 + $0x290] sm:$0xf]
                  %553 = vst [vmem:[%s379 + $0x158] sm:$0xf] %v552
                  %v554 = vld [vmem:[%s378 + $0x294] sm:$0xf]
                  %555 = vst [vmem:[%s379 + $0x15c] sm:$0xf] %v554
                  %v556 = vld [vmem:[%s378 + $0x298] sm:$0xf]
                  %557 = vst [vmem:[%s379 + $0x160] sm:$0xf] %v556
                  %v558 = vld [vmem:[%s378 + $0x29c] sm:$0xf]
                  %559 = vst [vmem:[%s379 + $0x164] sm:$0xf] %v558
                  %v560 = vld [vmem:[%s378 + $0x2a0] sm:$0xf]
                  %561 = vst [vmem:[%s379 + $0x168] sm:$0xf] %v560
                  %v562 = vld [vmem:[%s378 + $0x2a4] sm:$0xf]
                  %563 = vst [vmem:[%s379 + $0x16c] sm:$0xf] %v562
                  %v564 = vld [vmem:[%s378 + $0x2a8] sm:$0xf]
                  %565 = vst [vmem:[%s379 + $0x170] sm:$0xf] %v564
                  %v566 = vld [vmem:[%s378 + $0x2ac] sm:$0xf]
                  %567 = vst [vmem:[%s379 + $0x174] sm:$0xf] %v566
                  %v568 = vld [vmem:[%s378 + $0x2b0] sm:$0xf]
                  %569 = vst [vmem:[%s379 + $0x178] sm:$0xf] %v568
                  %v570 = vld [vmem:[%s378 + $0x2b4] sm:$0xf]
                  %571 = vst [vmem:[%s379 + $0x17c] sm:$0xf] %v570
                  %v572 = vld [vmem:[%s378 + $0x2b8] sm:$0xf]
                  %573 = vst [vmem:[%s379 + $0x180] sm:$0xf] %v572
                  %v574 = vld [vmem:[%s378 + $0x2bc] sm:$0xf]
                  %575 = vst [vmem:[%s379 + $0x184] sm:$0xf] %v574
                  %v576 = vld [vmem:[%s378 + $0x2c0] sm:$0xf]
                  %577 = vst [vmem:[%s379 + $0x188] sm:$0xf] %v576
                  %v578 = vld [vmem:[%s378 + $0x2c4] sm:$0xf]
                  %579 = vst [vmem:[%s379 + $0x18c] sm:$0xf] %v578
                  %v580 = vld [vmem:[%s378 + $0x2c8] sm:$0xf]
                  %581 = vst [vmem:[%s379 + $0x190] sm:$0xf] %v580
                  %v582 = vld [vmem:[%s378 + $0x2cc] sm:$0xf]
                  %583 = vst [vmem:[%s379 + $0x194] sm:$0xf] %v582
                  %v584 = vld [vmem:[%s378 + $0x2d0] sm:$0xf]
                  %585 = vst [vmem:[%s379 + $0x198] sm:$0xf] %v584
                  %v586 = vld [vmem:[%s378 + $0x2d4] sm:$0xf]
                  %587 = vst [vmem:[%s379 + $0x19c] sm:$0xf] %v586
                $region63: #{tpu_custom_call.1} parent=50 // loop_footer
                  %s377 = sadd.s32 1, %s373
                $region64: #{tpu_custom_call.1} parent=50 // loop_footer_branch
                  %372 = sbr.rel target = $region60
                $region65: #{tpu_custom_call.1} parent=50 // loop_exit
                  _
              $region51: #{tpu_custom_call.1} parent=35 // pred_fallthru
                _
            $region36: #{tpu_custom_call.1} parent=31 // pred_fallthru
              _
            // Predicated region
            $region37: #{tpu_custom_call.1} parent=31 // pred_check
              _
            $region38: #{tpu_custom_call.1} parent=31 // pred_check_branch
              %143 = sbr.rel (0) target = $region40
            $region39: #{tpu_custom_call.1} parent=31 // pred_region
              loop: start=0, step=1, limit=1
              $region41: #{tpu_custom_call.1} parent=39 // loop_pre_header
                _
              $region42: #{tpu_custom_call.1} parent=39 // loop_header
                %s146 = sphi 0, %s150
                %p147 = scmp.ge.s32.totalorder %s146, 1
                %s151 = sphi %s137, %s137
                %s152 = sphi %s134, %s134
              $region43: #{tpu_custom_call.1} parent=39 // loop_header_branch
                %149 = sbr.rel (%p147) target = $region47
              $region44: #{tpu_custom_call.1} parent=39 // loop_body
                %v153 = vld [vmem:[%s151] sm:$0xf]
                %154 = vst [vmem:[%s152] sm:$0xf] %v153
                %v155 = vld [vmem:[%s151 + $0x4] sm:$0xf]
                %156 = vst [vmem:[%s152 + $0x4] sm:$0xf] %v155
                %v157 = vld [vmem:[%s151 + $0x8] sm:$0xf]
                %158 = vst [vmem:[%s152 + $0x8] sm:$0xf] %v157
                %v159 = vld [vmem:[%s151 + $0xc] sm:$0xf]
                %160 = vst [vmem:[%s152 + $0xc] sm:$0xf] %v159
                %v161 = vld [vmem:[%s151 + $0x10] sm:$0xf]
                %162 = vst [vmem:[%s152 + $0x10] sm:$0xf] %v161
                %v163 = vld [vmem:[%s151 + $0x14] sm:$0xf]
                %164 = vst [vmem:[%s152 + $0x14] sm:$0xf] %v163
                %v165 = vld [vmem:[%s151 + $0x18] sm:$0xf]
                %166 = vst [vmem:[%s152 + $0x18] sm:$0xf] %v165
                %v167 = vld [vmem:[%s151 + $0x1c] sm:$0xf]
                %168 = vst [vmem:[%s152 + $0x1c] sm:$0xf] %v167
                %v169 = vld [vmem:[%s151 + $0x20] sm:$0xf]
                %170 = vst [vmem:[%s152 + $0x20] sm:$0xf] %v169
                %v171 = vld [vmem:[%s151 + $0x24] sm:$0xf]
                %172 = vst [vmem:[%s152 + $0x24] sm:$0xf] %v171
                %v173 = vld [vmem:[%s151 + $0x28] sm:$0xf]
                %174 = vst [vmem:[%s152 + $0x28] sm:$0xf] %v173
                %v175 = vld [vmem:[%s151 + $0x2c] sm:$0xf]
                %176 = vst [vmem:[%s152 + $0x2c] sm:$0xf] %v175
                %v177 = vld [vmem:[%s151 + $0x30] sm:$0xf]
                %178 = vst [vmem:[%s152 + $0x30] sm:$0xf] %v177
                %v179 = vld [vmem:[%s151 + $0x34] sm:$0xf]
                %180 = vst [vmem:[%s152 + $0x34] sm:$0xf] %v179
                %v181 = vld [vmem:[%s151 + $0x38] sm:$0xf]
                %182 = vst [vmem:[%s152 + $0x38] sm:$0xf] %v181
                %v183 = vld [vmem:[%s151 + $0x3c] sm:$0xf]
                %184 = vst [vmem:[%s152 + $0x3c] sm:$0xf] %v183
                %v185 = vld [vmem:[%s151 + $0x40] sm:$0xf]
                %186 = vst [vmem:[%s152 + $0x40] sm:$0xf] %v185
                %v187 = vld [vmem:[%s151 + $0x44] sm:$0xf]
                %188 = vst [vmem:[%s152 + $0x44] sm:$0xf] %v187
                %v189 = vld [vmem:[%s151 + $0x48] sm:$0xf]
                %190 = vst [vmem:[%s152 + $0x48] sm:$0xf] %v189
                %v191 = vld [vmem:[%s151 + $0x4c] sm:$0xf]
                %192 = vst [vmem:[%s152 + $0x4c] sm:$0xf] %v191
                %v193 = vld [vmem:[%s151 + $0x50] sm:$0xf]
                %194 = vst [vmem:[%s152 + $0x50] sm:$0xf] %v193
                %v195 = vld [vmem:[%s151 + $0x54] sm:$0xf]
                %196 = vst [vmem:[%s152 + $0x54] sm:$0xf] %v195
                %v197 = vld [vmem:[%s151 + $0x58] sm:$0xf]
                %198 = vst [vmem:[%s152 + $0x58] sm:$0xf] %v197
                %v199 = vld [vmem:[%s151 + $0x5c] sm:$0xf]
                %200 = vst [vmem:[%s152 + $0x5c] sm:$0xf] %v199
                %v201 = vld [vmem:[%s151 + $0x60] sm:$0xf]
                %202 = vst [vmem:[%s152 + $0x60] sm:$0xf] %v201
                %v203 = vld [vmem:[%s151 + $0x64] sm:$0xf]
                %204 = vst [vmem:[%s152 + $0x64] sm:$0xf] %v203
                %v205 = vld [vmem:[%s151 + $0xd0] sm:$0xf]
                %206 = vst [vmem:[%s152 + $0x68] sm:$0xf] %v205
                %v207 = vld [vmem:[%s151 + $0xd4] sm:$0xf]
                %208 = vst [vmem:[%s152 + $0x6c] sm:$0xf] %v207
                %v209 = vld [vmem:[%s151 + $0xd8] sm:$0xf]
                %210 = vst [vmem:[%s152 + $0x70] sm:$0xf] %v209
                %v211 = vld [vmem:[%s151 + $0xdc] sm:$0xf]
                %212 = vst [vmem:[%s152 + $0x74] sm:$0xf] %v211
                %v213 = vld [vmem:[%s151 + $0xe0] sm:$0xf]
                %214 = vst [vmem:[%s152 + $0x78] sm:$0xf] %v213
                %v215 = vld [vmem:[%s151 + $0xe4] sm:$0xf]
                %216 = vst [vmem:[%s152 + $0x7c] sm:$0xf] %v215
                %v217 = vld [vmem:[%s151 + $0xe8] sm:$0xf]
                %218 = vst [vmem:[%s152 + $0x80] sm:$0xf] %v217
                %v219 = vld [vmem:[%s151 + $0xec] sm:$0xf]
                %220 = vst [vmem:[%s152 + $0x84] sm:$0xf] %v219
                %v221 = vld [vmem:[%s151 + $0xf0] sm:$0xf]
                %222 = vst [vmem:[%s152 + $0x88] sm:$0xf] %v221
                %v223 = vld [vmem:[%s151 + $0xf4] sm:$0xf]
                %224 = vst [vmem:[%s152 + $0x8c] sm:$0xf] %v223
                %v225 = vld [vmem:[%s151 + $0xf8] sm:$0xf]
                %226 = vst [vmem:[%s152 + $0x90] sm:$0xf] %v225
                %v227 = vld [vmem:[%s151 + $0xfc] sm:$0xf]
                %228 = vst [vmem:[%s152 + $0x94] sm:$0xf] %v227
                %v229 = vld [vmem:[%s151 + $0x100] sm:$0xf]
                %230 = vst [vmem:[%s152 + $0x98] sm:$0xf] %v229
                %v231 = vld [vmem:[%s151 + $0x104] sm:$0xf]
                %232 = vst [vmem:[%s152 + $0x9c] sm:$0xf] %v231
                %v233 = vld [vmem:[%s151 + $0x108] sm:$0xf]
                %234 = vst [vmem:[%s152 + $0xa0] sm:$0xf] %v233
                %v235 = vld [vmem:[%s151 + $0x10c] sm:$0xf]
                %236 = vst [vmem:[%s152 + $0xa4] sm:$0xf] %v235
                %v237 = vld [vmem:[%s151 + $0x110] sm:$0xf]
                %238 = vst [vmem:[%s152 + $0xa8] sm:$0xf] %v237
                %v239 = vld [vmem:[%s151 + $0x114] sm:$0xf]
                %240 = vst [vmem:[%s152 + $0xac] sm:$0xf] %v239
                %v241 = vld [vmem:[%s151 + $0x118] sm:$0xf]
                %242 = vst [vmem:[%s152 + $0xb0] sm:$0xf] %v241
                %v243 = vld [vmem:[%s151 + $0x11c] sm:$0xf]
                %244 = vst [vmem:[%s152 + $0xb4] sm:$0xf] %v243
                %v245 = vld [vmem:[%s151 + $0x120] sm:$0xf]
                %246 = vst [vmem:[%s152 + $0xb8] sm:$0xf] %v245
                %v247 = vld [vmem:[%s151 + $0x124] sm:$0xf]
                %248 = vst [vmem:[%s152 + $0xbc] sm:$0xf] %v247
                %v249 = vld [vmem:[%s151 + $0x128] sm:$0xf]
                %250 = vst [vmem:[%s152 + $0xc0] sm:$0xf] %v249
                %v251 = vld [vmem:[%s151 + $0x12c] sm:$0xf]
                %252 = vst [vmem:[%s152 + $0xc4] sm:$0xf] %v251
                %v253 = vld [vmem:[%s151 + $0x130] sm:$0xf]
                %254 = vst [vmem:[%s152 + $0xc8] sm:$0xf] %v253
                %v255 = vld [vmem:[%s151 + $0x134] sm:$0xf]
                %256 = vst [vmem:[%s152 + $0xcc] sm:$0xf] %v255
                %v257 = vld [vmem:[%s151 + $0x1a0] sm:$0xf]
                %258 = vst [vmem:[%s152 + $0xd0] sm:$0xf] %v257
                %v259 = vld [vmem:[%s151 + $0x1a4] sm:$0xf]
                %260 = vst [vmem:[%s152 + $0xd4] sm:$0xf] %v259
                %v261 = vld [vmem:[%s151 + $0x1a8] sm:$0xf]
                %262 = vst [vmem:[%s152 + $0xd8] sm:$0xf] %v261
                %v263 = vld [vmem:[%s151 + $0x1ac] sm:$0xf]
                %264 = vst [vmem:[%s152 + $0xdc] sm:$0xf] %v263
                %v265 = vld [vmem:[%s151 + $0x1b0] sm:$0xf]
                %266 = vst [vmem:[%s152 + $0xe0] sm:$0xf] %v265
                %v267 = vld [vmem:[%s151 + $0x1b4] sm:$0xf]
                %268 = vst [vmem:[%s152 + $0xe4] sm:$0xf] %v267
                %v269 = vld [vmem:[%s151 + $0x1b8] sm:$0xf]
                %270 = vst [vmem:[%s152 + $0xe8] sm:$0xf] %v269
                %v271 = vld [vmem:[%s151 + $0x1bc] sm:$0xf]
                %272 = vst [vmem:[%s152 + $0xec] sm:$0xf] %v271
                %v273 = vld [vmem:[%s151 + $0x1c0] sm:$0xf]
                %274 = vst [vmem:[%s152 + $0xf0] sm:$0xf] %v273
                %v275 = vld [vmem:[%s151 + $0x1c4] sm:$0xf]
                %276 = vst [vmem:[%s152 + $0xf4] sm:$0xf] %v275
                %v277 = vld [vmem:[%s151 + $0x1c8] sm:$0xf]
                %278 = vst [vmem:[%s152 + $0xf8] sm:$0xf] %v277
                %v279 = vld [vmem:[%s151 + $0x1cc] sm:$0xf]
                %280 = vst [vmem:[%s152 + $0xfc] sm:$0xf] %v279
                %v281 = vld [vmem:[%s151 + $0x1d0] sm:$0xf]
                %282 = vst [vmem:[%s152 + $0x100] sm:$0xf] %v281
                %v283 = vld [vmem:[%s151 + $0x1d4] sm:$0xf]
                %284 = vst [vmem:[%s152 + $0x104] sm:$0xf] %v283
                %v285 = vld [vmem:[%s151 + $0x1d8] sm:$0xf]
                %286 = vst [vmem:[%s152 + $0x108] sm:$0xf] %v285
                %v287 = vld [vmem:[%s151 + $0x1dc] sm:$0xf]
                %288 = vst [vmem:[%s152 + $0x10c] sm:$0xf] %v287
                %v289 = vld [vmem:[%s151 + $0x1e0] sm:$0xf]
                %290 = vst [vmem:[%s152 + $0x110] sm:$0xf] %v289
                %v291 = vld [vmem:[%s151 + $0x1e4] sm:$0xf]
                %292 = vst [vmem:[%s152 + $0x114] sm:$0xf] %v291
                %v293 = vld [vmem:[%s151 + $0x1e8] sm:$0xf]
                %294 = vst [vmem:[%s152 + $0x118] sm:$0xf] %v293
                %v295 = vld [vmem:[%s151 + $0x1ec] sm:$0xf]
                %296 = vst [vmem:[%s152 + $0x11c] sm:$0xf] %v295
                %v297 = vld [vmem:[%s151 + $0x1f0] sm:$0xf]
                %298 = vst [vmem:[%s152 + $0x120] sm:$0xf] %v297
                %v299 = vld [vmem:[%s151 + $0x1f4] sm:$0xf]
                %300 = vst [vmem:[%s152 + $0x124] sm:$0xf] %v299
                %v301 = vld [vmem:[%s151 + $0x1f8] sm:$0xf]
                %302 = vst [vmem:[%s152 + $0x128] sm:$0xf] %v301
                %v303 = vld [vmem:[%s151 + $0x1fc] sm:$0xf]
                %304 = vst [vmem:[%s152 + $0x12c] sm:$0xf] %v303
                %v305 = vld [vmem:[%s151 + $0x200] sm:$0xf]
                %306 = vst [vmem:[%s152 + $0x130] sm:$0xf] %v305
                %v307 = vld [vmem:[%s151 + $0x204] sm:$0xf]
                %308 = vst [vmem:[%s152 + $0x134] sm:$0xf] %v307
                %v309 = vld [vmem:[%s151 + $0x270] sm:$0xf]
                %310 = vst [vmem:[%s152 + $0x138] sm:$0xf] %v309
                %v311 = vld [vmem:[%s151 + $0x274] sm:$0xf]
                %312 = vst [vmem:[%s152 + $0x13c] sm:$0xf] %v311
                %v313 = vld [vmem:[%s151 + $0x278] sm:$0xf]
                %314 = vst [vmem:[%s152 + $0x140] sm:$0xf] %v313
                %v315 = vld [vmem:[%s151 + $0x27c] sm:$0xf]
                %316 = vst [vmem:[%s152 + $0x144] sm:$0xf] %v315
                %v317 = vld [vmem:[%s151 + $0x280] sm:$0xf]
                %318 = vst [vmem:[%s152 + $0x148] sm:$0xf] %v317
                %v319 = vld [vmem:[%s151 + $0x284] sm:$0xf]
                %320 = vst [vmem:[%s152 + $0x14c] sm:$0xf] %v319
                %v321 = vld [vmem:[%s151 + $0x288] sm:$0xf]
                %322 = vst [vmem:[%s152 + $0x150] sm:$0xf] %v321
                %v323 = vld [vmem:[%s151 + $0x28c] sm:$0xf]
                %324 = vst [vmem:[%s152 + $0x154] sm:$0xf] %v323
                %v325 = vld [vmem:[%s151 + $0x290] sm:$0xf]
                %326 = vst [vmem:[%s152 + $0x158] sm:$0xf] %v325
                %v327 = vld [vmem:[%s151 + $0x294] sm:$0xf]
                %328 = vst [vmem:[%s152 + $0x15c] sm:$0xf] %v327
                %v329 = vld [vmem:[%s151 + $0x298] sm:$0xf]
                %330 = vst [vmem:[%s152 + $0x160] sm:$0xf] %v329
                %v331 = vld [vmem:[%s151 + $0x29c] sm:$0xf]
                %332 = vst [vmem:[%s152 + $0x164] sm:$0xf] %v331
                %v333 = vld [vmem:[%s151 + $0x2a0] sm:$0xf]
                %334 = vst [vmem:[%s152 + $0x168] sm:$0xf] %v333
                %v335 = vld [vmem:[%s151 + $0x2a4] sm:$0xf]
                %336 = vst [vmem:[%s152 + $0x16c] sm:$0xf] %v335
                %v337 = vld [vmem:[%s151 + $0x2a8] sm:$0xf]
                %338 = vst [vmem:[%s152 + $0x170] sm:$0xf] %v337
                %v339 = vld [vmem:[%s151 + $0x2ac] sm:$0xf]
                %340 = vst [vmem:[%s152 + $0x174] sm:$0xf] %v339
                %v341 = vld [vmem:[%s151 + $0x2b0] sm:$0xf]
                %342 = vst [vmem:[%s152 + $0x178] sm:$0xf] %v341
                %v343 = vld [vmem:[%s151 + $0x2b4] sm:$0xf]
                %344 = vst [vmem:[%s152 + $0x17c] sm:$0xf] %v343
                %v345 = vld [vmem:[%s151 + $0x2b8] sm:$0xf]
                %346 = vst [vmem:[%s152 + $0x180] sm:$0xf] %v345
                %v347 = vld [vmem:[%s151 + $0x2bc] sm:$0xf]
                %348 = vst [vmem:[%s152 + $0x184] sm:$0xf] %v347
                %v349 = vld [vmem:[%s151 + $0x2c0] sm:$0xf]
                %350 = vst [vmem:[%s152 + $0x188] sm:$0xf] %v349
                %v351 = vld [vmem:[%s151 + $0x2c4] sm:$0xf]
                %352 = vst [vmem:[%s152 + $0x18c] sm:$0xf] %v351
                %v353 = vld [vmem:[%s151 + $0x2c8] sm:$0xf]
                %354 = vst [vmem:[%s152 + $0x190] sm:$0xf] %v353
                %v355 = vld [vmem:[%s151 + $0x2cc] sm:$0xf]
                %356 = vst [vmem:[%s152 + $0x194] sm:$0xf] %v355
                %v357 = vld [vmem:[%s151 + $0x2d0] sm:$0xf]
                %358 = vst [vmem:[%s152 + $0x198] sm:$0xf] %v357
                %v359 = vld [vmem:[%s151 + $0x2d4] sm:$0xf]
                %360 = vst [vmem:[%s152 + $0x19c] sm:$0xf] %v359
              $region45: #{tpu_custom_call.1} parent=39 // loop_footer
                %s150 = sadd.s32 1, %s146
              $region46: #{tpu_custom_call.1} parent=39 // loop_footer_branch
                %145 = sbr.rel target = $region42
              $region47: #{tpu_custom_call.1} parent=39 // loop_exit
                _
            $region40: #{tpu_custom_call.1} parent=31 // pred_fallthru
              _
          $region32: #{tpu_custom_call.1} parent=27 // pred_fallthru
            _
          %588 = vnop
        $region28: #{tpu_custom_call.1} parent=23 // pred_fallthru
          _
      $region24: #{tpu_custom_call.1} parent=5 // pred_fallthru
        _
      %p589 = scmp.le.s32.totalorder 1, %s9
      %p590 = scmp.lt.s32.totalorder %s9, 3
      %p591 = pnand %p589, %p590
      %p592 = pneg %p591
      // Predicated region
      $region66: #{tpu_custom_call.1} parent=5 // pred_check
        _
      $region67: #{tpu_custom_call.1} parent=5 // pred_check_branch
        %594 = sbr.rel (%p591) target = $region69
      $region68: #{tpu_custom_call.1} parent=5 // pred_region
        %s595 = ssub.s32 %s9, 1
        %s596 = sand.u32 %s22, 1
        %s597 = sand.u32 %s22, 1
        %s598 = smul.addr %s597, 416
        %s599 = scalar_lea.vmem [#allocation2], %s598
        // Predicated region
        $region70: #{tpu_custom_call.1} parent=68 // pred_check
          %p600 = pneg %p35
        $region71: #{tpu_custom_call.1} parent=68 // pred_check_branch
          %602 = sbr.rel (%p600) target = $region73
        $region72: #{tpu_custom_call.1} parent=68 // pred_region
          _
        $region73: #{tpu_custom_call.1} parent=68 // pred_fallthru
          _
        %s603 = sand.u32 %s22, 1
        %s604 = sand.u32 %s22, 1
        %s605 = smul.addr %s604, 416
        %s606 = scalar_lea.vmem [#allocation2], %s605
        %p607 = pneg %p35
        %p608 = pneg %p32
        %p609 = pneg %p56
        %p610 = pneg %p53
        %p611 = pneg %p77
        %p612 = pneg %p74
        %p613 = pneg %p103
        %p614 = pneg %p100
        %s615 = smul.u32 26, %s14
        %p616 = scmp.lt.s32.totalorder %s615, 51
        %s617 = scalar_select %p616, %s615, 51
        %s618 = smul.addr %s617, 8
        %s619 = scalar_lea.vmem %s3, %s618
        %s620 = smul.u32 26, %s14
        %s621 = smul.u32 26, %s14
        %p622 = scmp.lt.s32.totalorder %s621, 51
        %s623 = scalar_select %p622, %s621, 51
        %s624 = smul.addr %s623, 8
        %s625 = scalar_lea.vmem %s3, %s624
        %s626 = smul.u32 26, %s14
        %v628 = vld [vmem:[%s599] sm:$0xf]
        %v629 = vld [vmem:[%s599 + $0x4] sm:$0xf]
        %v630 = vld [vmem:[%s599 + $0x8] sm:$0xf]
        %v631 = vld [vmem:[%s599 + $0xc] sm:$0xf]
        %v632 = vld [vmem:[%s599 + $0x10] sm:$0xf]
        %v633 = vld [vmem:[%s599 + $0x14] sm:$0xf]
        %v634 = vld [vmem:[%s599 + $0x18] sm:$0xf]
        %v635 = vld [vmem:[%s599 + $0x1c] sm:$0xf]
        %v636 = vld [vmem:[%s599 + $0x20] sm:$0xf]
        %v637 = vld [vmem:[%s599 + $0x24] sm:$0xf]
        %v638 = vld [vmem:[%s599 + $0x28] sm:$0xf]
        %v639 = vld [vmem:[%s599 + $0x2c] sm:$0xf]
        %v640 = vld [vmem:[%s599 + $0x30] sm:$0xf]
        %v641 = vld [vmem:[%s599 + $0x34] sm:$0xf]
        %v642 = vld [vmem:[%s599 + $0x38] sm:$0xf]
        %v643 = vld [vmem:[%s599 + $0x3c] sm:$0xf]
        %v644 = vld [vmem:[%s599 + $0x40] sm:$0xf]
        %v645 = vld [vmem:[%s599 + $0x44] sm:$0xf]
        %v646 = vld [vmem:[%s599 + $0x48] sm:$0xf]
        %v647 = vld [vmem:[%s599 + $0x4c] sm:$0xf]
        %v648 = vld [vmem:[%s599 + $0x50] sm:$0xf]
        %v649 = vld [vmem:[%s599 + $0x54] sm:$0xf]
        %v650 = vld [vmem:[%s599 + $0x58] sm:$0xf]
        %v651 = vld [vmem:[%s599 + $0x5c] sm:$0xf]
        %v652 = vld [vmem:[%s599 + $0x60] sm:$0xf]
        %v653 = vld [vmem:[%s599 + $0x64] sm:$0xf]
        %v654 = vld [vmem:[%s599 + $0x68] sm:$0xf]
        %v655 = vld [vmem:[%s599 + $0x6c] sm:$0xf]
        %v656 = vld [vmem:[%s599 + $0x70] sm:$0xf]
        %v657 = vld [vmem:[%s599 + $0x74] sm:$0xf]
        %v658 = vld [vmem:[%s599 + $0x78] sm:$0xf]
        %v659 = vld [vmem:[%s599 + $0x7c] sm:$0xf]
        %v660 = vld [vmem:[%s599 + $0x80] sm:$0xf]
        %v661 = vld [vmem:[%s599 + $0x84] sm:$0xf]
        %v662 = vld [vmem:[%s599 + $0x88] sm:$0xf]
        %v663 = vld [vmem:[%s599 + $0x8c] sm:$0xf]
        %v664 = vld [vmem:[%s599 + $0x90] sm:$0xf]
        %v665 = vld [vmem:[%s599 + $0x94] sm:$0xf]
        %v666 = vld [vmem:[%s599 + $0x98] sm:$0xf]
        %v667 = vld [vmem:[%s599 + $0x9c] sm:$0xf]
        %v668 = vld [vmem:[%s599 + $0xa0] sm:$0xf]
        %v669 = vld [vmem:[%s599 + $0xa4] sm:$0xf]
        %v670 = vld [vmem:[%s599 + $0xa8] sm:$0xf]
        %v671 = vld [vmem:[%s599 + $0xac] sm:$0xf]
        %v672 = vld [vmem:[%s599 + $0xb0] sm:$0xf]
        %v673 = vld [vmem:[%s599 + $0xb4] sm:$0xf]
        %v674 = vld [vmem:[%s599 + $0xb8] sm:$0xf]
        %v675 = vld [vmem:[%s599 + $0xbc] sm:$0xf]
        %v676 = vld [vmem:[%s599 + $0xc0] sm:$0xf]
        %v677 = vld [vmem:[%s599 + $0xc4] sm:$0xf]
        %v678 = vld [vmem:[%s599 + $0xc8] sm:$0xf]
        %v679 = vld [vmem:[%s599 + $0xcc] sm:$0xf]
        %v680 = vld [vmem:[%s599 + $0xd0] sm:$0xf]
        %v681 = vld [vmem:[%s599 + $0xd4] sm:$0xf]
        %v682 = vld [vmem:[%s599 + $0xd8] sm:$0xf]
        %v683 = vld [vmem:[%s599 + $0xdc] sm:$0xf]
        %v684 = vld [vmem:[%s599 + $0xe0] sm:$0xf]
        %v685 = vld [vmem:[%s599 + $0xe4] sm:$0xf]
        %v686 = vld [vmem:[%s599 + $0xe8] sm:$0xf]
        %v687 = vld [vmem:[%s599 + $0xec] sm:$0xf]
        %v688 = vld [vmem:[%s599 + $0xf0] sm:$0xf]
        %v689 = vld [vmem:[%s599 + $0xf4] sm:$0xf]
        %v690 = vld [vmem:[%s599 + $0xf8] sm:$0xf]
        %v691 = vld [vmem:[%s599 + $0xfc] sm:$0xf]
        %v692 = vld [vmem:[%s599 + $0x100] sm:$0xf]
        %v693 = vld [vmem:[%s599 + $0x104] sm:$0xf]
        %v694 = vld [vmem:[%s599 + $0x108] sm:$0xf]
        %v695 = vld [vmem:[%s599 + $0x10c] sm:$0xf]
        %v696 = vld [vmem:[%s599 + $0x110] sm:$0xf]
        %v697 = vld [vmem:[%s599 + $0x114] sm:$0xf]
        %v698 = vld [vmem:[%s599 + $0x118] sm:$0xf]
        %v699 = vld [vmem:[%s599 + $0x11c] sm:$0xf]
        %v700 = vld [vmem:[%s599 + $0x120] sm:$0xf]
        %v701 = vld [vmem:[%s599 + $0x124] sm:$0xf]
        %v702 = vld [vmem:[%s599 + $0x128] sm:$0xf]
        %v703 = vld [vmem:[%s599 + $0x12c] sm:$0xf]
        %v704 = vld [vmem:[%s599 + $0x130] sm:$0xf]
        %v705 = vld [vmem:[%s599 + $0x134] sm:$0xf]
        %v706 = vld [vmem:[%s599 + $0x138] sm:$0xf]
        %v707 = vld [vmem:[%s599 + $0x13c] sm:$0xf]
        %v708 = vld [vmem:[%s599 + $0x140] sm:$0xf]
        %v709 = vld [vmem:[%s599 + $0x144] sm:$0xf]
        %v710 = vld [vmem:[%s599 + $0x148] sm:$0xf]
        %v711 = vld [vmem:[%s599 + $0x14c] sm:$0xf]
        %v712 = vld [vmem:[%s599 + $0x150] sm:$0xf]
        %v713 = vld [vmem:[%s599 + $0x154] sm:$0xf]
        %v714 = vld [vmem:[%s599 + $0x158] sm:$0xf]
        %v715 = vld [vmem:[%s599 + $0x15c] sm:$0xf]
        %v716 = vld [vmem:[%s599 + $0x160] sm:$0xf]
        %v717 = vld [vmem:[%s599 + $0x164] sm:$0xf]
        %v718 = vld [vmem:[%s599 + $0x168] sm:$0xf]
        %v719 = vld [vmem:[%s599 + $0x16c] sm:$0xf]
        %v720 = vld [vmem:[%s599 + $0x170] sm:$0xf]
        %v721 = vld [vmem:[%s599 + $0x174] sm:$0xf]
        %v722 = vld [vmem:[%s599 + $0x178] sm:$0xf]
        %v723 = vld [vmem:[%s599 + $0x17c] sm:$0xf]
        %v724 = vld [vmem:[%s599 + $0x180] sm:$0xf]
        %v725 = vld [vmem:[%s599 + $0x184] sm:$0xf]
        %v726 = vld [vmem:[%s599 + $0x188] sm:$0xf]
        %v727 = vld [vmem:[%s599 + $0x18c] sm:$0xf]
        %v728 = vld [vmem:[%s599 + $0x190] sm:$0xf]
        %v729 = vld [vmem:[%s599 + $0x194] sm:$0xf]
        %v730 = vld [vmem:[%s599 + $0x198] sm:$0xf]
        %v731 = vld [vmem:[%s599 + $0x19c] sm:$0xf]
        %v732 = vld [vmem:[%s1] sm:$0xf]
        %v733 = vld [vmem:[%s1 + $0x4] sm:$0xf]
        %v734 = vld [vmem:[%s1 + $0x8] sm:$0xf]
        %v735 = vld [vmem:[%s1 + $0xc] sm:$0x3]
        %v840 = vunpack.c.l.b16 %v628
        %v841 = vunpack.c.l.b16 %v629
        %v842 = vunpack.c.l.b16 %v630
        %v843 = vunpack.c.l.b16 %v631
        %v844 = vunpack.c.l.b16 %v632
        %v845 = vunpack.c.l.b16 %v633
        %v846 = vunpack.c.l.b16 %v634
        %v847 = vunpack.c.l.b16 %v635
        %v848 = vunpack.c.l.b16 %v636
        %v849 = vunpack.c.l.b16 %v637
        %v850 = vunpack.c.l.b16 %v638
        %v851 = vunpack.c.l.b16 %v639
        %v852 = vunpack.c.l.b16 %v640
        %v853 = vunpack.c.l.b16 %v641
        %v854 = vunpack.c.l.b16 %v642
        %v855 = vunpack.c.l.b16 %v643
        %v856 = vunpack.c.l.b16 %v644
        %v857 = vunpack.c.l.b16 %v645
        %v858 = vunpack.c.l.b16 %v646
        %v859 = vunpack.c.l.b16 %v647
        %v860 = vunpack.c.l.b16 %v648
        %v861 = vunpack.c.l.b16 %v649
        %v862 = vunpack.c.l.b16 %v650
        %v863 = vunpack.c.l.b16 %v651
        %v864 = vunpack.c.l.b16 %v652
        %v865 = vunpack.c.l.b16 %v653
        %v866 = vunpack.c.l.b16 %v654
        %v867 = vunpack.c.l.b16 %v655
        %v868 = vunpack.c.l.b16 %v656
        %v869 = vunpack.c.l.b16 %v657
        %v870 = vunpack.c.l.b16 %v658
        %v871 = vunpack.c.l.b16 %v659
        %v872 = vunpack.c.l.b16 %v660
        %v873 = vunpack.c.l.b16 %v661
        %v874 = vunpack.c.l.b16 %v662
        %v875 = vunpack.c.l.b16 %v663
        %v876 = vunpack.c.l.b16 %v664
        %v877 = vunpack.c.l.b16 %v665
        %v878 = vunpack.c.l.b16 %v666
        %v879 = vunpack.c.l.b16 %v667
        %v880 = vunpack.c.l.b16 %v668
        %v881 = vunpack.c.l.b16 %v669
        %v882 = vunpack.c.l.b16 %v670
        %v883 = vunpack.c.l.b16 %v671
        %v884 = vunpack.c.l.b16 %v672
        %v885 = vunpack.c.l.b16 %v673
        %v886 = vunpack.c.l.b16 %v674
        %v887 = vunpack.c.l.b16 %v675
        %v888 = vunpack.c.l.b16 %v676
        %v889 = vunpack.c.l.b16 %v677
        %v890 = vunpack.c.l.b16 %v678
        %v891 = vunpack.c.l.b16 %v679
        %v892 = vunpack.c.l.b16 %v680
        %v893 = vunpack.c.l.b16 %v681
        %v894 = vunpack.c.l.b16 %v682
        %v895 = vunpack.c.l.b16 %v683
        %v896 = vunpack.c.l.b16 %v684
        %v897 = vunpack.c.l.b16 %v685
        %v898 = vunpack.c.l.b16 %v686
        %v899 = vunpack.c.l.b16 %v687
        %v900 = vunpack.c.l.b16 %v688
        %v901 = vunpack.c.l.b16 %v689
        %v902 = vunpack.c.l.b16 %v690
        %v903 = vunpack.c.l.b16 %v691
        %v904 = vunpack.c.l.b16 %v692
        %v905 = vunpack.c.l.b16 %v693
        %v906 = vunpack.c.l.b16 %v694
        %v907 = vunpack.c.l.b16 %v695
        %v908 = vunpack.c.l.b16 %v696
        %v909 = vunpack.c.l.b16 %v697
        %v910 = vunpack.c.l.b16 %v698
        %v911 = vunpack.c.l.b16 %v699
        %v912 = vunpack.c.l.b16 %v700
        %v913 = vunpack.c.l.b16 %v701
        %v914 = vunpack.c.l.b16 %v702
        %v915 = vunpack.c.l.b16 %v703
        %v916 = vunpack.c.l.b16 %v704
        %v917 = vunpack.c.l.b16 %v705
        %v918 = vunpack.c.l.b16 %v706
        %v919 = vunpack.c.l.b16 %v707
        %v920 = vunpack.c.l.b16 %v708
        %v921 = vunpack.c.l.b16 %v709
        %v922 = vunpack.c.l.b16 %v710
        %v923 = vunpack.c.l.b16 %v711
        %v924 = vunpack.c.l.b16 %v712
        %v925 = vunpack.c.l.b16 %v713
        %v926 = vunpack.c.l.b16 %v714
        %v927 = vunpack.c.l.b16 %v715
        %v928 = vunpack.c.l.b16 %v716
        %v929 = vunpack.c.l.b16 %v717
        %v930 = vunpack.c.l.b16 %v718
        %v931 = vunpack.c.l.b16 %v719
        %v932 = vunpack.c.l.b16 %v720
        %v933 = vunpack.c.l.b16 %v721
        %v934 = vunpack.c.l.b16 %v722
        %v935 = vunpack.c.l.b16 %v723
        %v936 = vunpack.c.l.b16 %v724
        %v937 = vunpack.c.l.b16 %v725
        %v938 = vunpack.c.l.b16 %v726
        %v939 = vunpack.c.l.b16 %v727
        %v940 = vunpack.c.l.b16 %v728
        %v941 = vunpack.c.l.b16 %v729
        %v942 = vunpack.c.l.b16 %v730
        %v943 = vunpack.c.l.b16 %v731
        %v944 = vpack.c.b16 %v841, %v840
        %v945 = vpack.c.b16 %v843, %v842
        %v946 = vpack.c.b16 %v845, %v844
        %v947 = vpack.c.b16 %v847, %v846
        %v948 = vpack.c.b16 %v849, %v848
        %v949 = vpack.c.b16 %v851, %v850
        %v950 = vpack.c.b16 %v853, %v852
        %v951 = vpack.c.b16 %v855, %v854
        %v952 = vpack.c.b16 %v857, %v856
        %v953 = vpack.c.b16 %v859, %v858
        %v954 = vpack.c.b16 %v861, %v860
        %v955 = vpack.c.b16 %v863, %v862
        %v956 = vpack.c.b16 %v865, %v864
        %v957 = vpack.c.b16 %v867, %v866
        %v958 = vpack.c.b16 %v869, %v868
        %v959 = vpack.c.b16 %v871, %v870
        %v960 = vpack.c.b16 %v873, %v872
        %v961 = vpack.c.b16 %v875, %v874
        %v962 = vpack.c.b16 %v877, %v876
        %v963 = vpack.c.b16 %v879, %v878
        %v964 = vpack.c.b16 %v881, %v880
        %v965 = vpack.c.b16 %v883, %v882
        %v966 = vpack.c.b16 %v885, %v884
        %v967 = vpack.c.b16 %v887, %v886
        %v968 = vpack.c.b16 %v889, %v888
        %v969 = vpack.c.b16 %v891, %v890
        %v970 = vpack.c.b16 %v893, %v892
        %v971 = vpack.c.b16 %v895, %v894
        %v972 = vpack.c.b16 %v897, %v896
        %v973 = vpack.c.b16 %v899, %v898
        %v974 = vpack.c.b16 %v901, %v900
        %v975 = vpack.c.b16 %v903, %v902
        %v976 = vpack.c.b16 %v905, %v904
        %v977 = vpack.c.b16 %v907, %v906
        %v978 = vpack.c.b16 %v909, %v908
        %v979 = vpack.c.b16 %v911, %v910
        %v980 = vpack.c.b16 %v913, %v912
        %v981 = vpack.c.b16 %v915, %v914
        %v982 = vpack.c.b16 %v917, %v916
        %v983 = vpack.c.b16 %v919, %v918
        %v984 = vpack.c.b16 %v921, %v920
        %v985 = vpack.c.b16 %v923, %v922
        %v986 = vpack.c.b16 %v925, %v924
        %v987 = vpack.c.b16 %v927, %v926
        %v988 = vpack.c.b16 %v929, %v928
        %v989 = vpack.c.b16 %v931, %v930
        %v990 = vpack.c.b16 %v933, %v932
        %v991 = vpack.c.b16 %v935, %v934
        %v992 = vpack.c.b16 %v937, %v936
        %v993 = vpack.c.b16 %v939, %v938
        %v994 = vpack.c.b16 %v941, %v940
        %v995 = vpack.c.b16 %v943, %v942
        %v1000 = vunpack.c.l.b16 %v732
        %v1001 = vunpack.c.l.b16 %v733
        %v1002 = vunpack.c.l.b16 %v734
        %v1003 = vunpack.c.l.b16 %v735
        %v1004 = vpack.c.b16 %v1001, %v1000
        %v1005 = vpack.c.b16 %v1003, %v1002
        %vm1007 = vcmask 220160
        %v1009 = vsel %vm1007, %v944, 0
        %v1012 = vsel %vm1007, %v945, 0
        %v1015 = vsel %vm1007, %v946, 0
        %v1018 = vsel %vm1007, %v947, 0
        %v1021 = vsel %vm1007, %v948, 0
        %v1024 = vsel %vm1007, %v949, 0
        %v1027 = vsel %vm1007, %v950, 0
        %v1030 = vsel %vm1007, %v951, 0
        %v1033 = vsel %vm1007, %v952, 0
        %v1036 = vsel %vm1007, %v953, 0
        %v1039 = vsel %vm1007, %v954, 0
        %v1042 = vsel %vm1007, %v955, 0
        %v1045 = vsel %vm1007, %v956, 0
        %v1048 = vsel %vm1007, %v957, 0
        %v1051 = vsel %vm1007, %v958, 0
        %v1054 = vsel %vm1007, %v959, 0
        %v1057 = vsel %vm1007, %v960, 0
        %v1060 = vsel %vm1007, %v961, 0
        %v1063 = vsel %vm1007, %v962, 0
        %v1066 = vsel %vm1007, %v963, 0
        %v1069 = vsel %vm1007, %v964, 0
        %v1072 = vsel %vm1007, %v965, 0
        %v1075 = vsel %vm1007, %v966, 0
        %v1078 = vsel %vm1007, %v967, 0
        %v1081 = vsel %vm1007, %v968, 0
        %v1084 = vsel %vm1007, %v969, 0
        %v1087 = vsel %vm1007, %v970, 0
        %v1090 = vsel %vm1007, %v971, 0
        %v1093 = vsel %vm1007, %v972, 0
        %v1096 = vsel %vm1007, %v973, 0
        %v1099 = vsel %vm1007, %v974, 0
        %v1102 = vsel %vm1007, %v975, 0
        %v1105 = vsel %vm1007, %v976, 0
        %v1108 = vsel %vm1007, %v977, 0
        %v1111 = vsel %vm1007, %v978, 0
        %v1114 = vsel %vm1007, %v979, 0
        %v1117 = vsel %vm1007, %v980, 0
        %v1120 = vsel %vm1007, %v981, 0
        %v1123 = vsel %vm1007, %v982, 0
        %v1126 = vsel %vm1007, %v983, 0
        %v1129 = vsel %vm1007, %v984, 0
        %v1132 = vsel %vm1007, %v985, 0
        %v1135 = vsel %vm1007, %v986, 0
        %v1138 = vsel %vm1007, %v987, 0
        %v1141 = vsel %vm1007, %v988, 0
        %v1144 = vsel %vm1007, %v989, 0
        %v1147 = vsel %vm1007, %v990, 0
        %v1150 = vsel %vm1007, %v991, 0
        %v1153 = vsel %vm1007, %v992, 0
        %v1156 = vsel %vm1007, %v993, 0
        %v1159 = vsel %vm1007, %v994, 0
        %v1162 = vsel %vm1007, %v995, 0
        %vm1164 = vcmask 1044480
        %vm1165 = vcmask 1045504
        %v1166 = vsel %vm1164, 4294967295, 65535
        %v1167 = vsel %vm1165, %v1166, 0
        %v1169 = vand.u32 %v1005, %v1167
        %1171 = vmatprep.subr.bf16.mxu0 0
        %1172 = vmatpush1.bf16.msra.mxu0 %v1004
        %1173 = vmatprep.subr.bf16.mxu0 0
        %1174 = vmatpush1.bf16.msra.mxu0 %v1169
        %1175 = vmatprep.subr.bf16.mxu0 0
        %1176 = vmatpush1.bf16.msra.mxu0 0
        %1177 = vmatprep.subr.bf16.mxu0 0
        %1178 = vmatpush1.bf16.msra.mxu0 0
        %1179 = vmatprep.subr.bf16.mxu0 0
        %1180 = vmatpush1.bf16.msra.mxu0 0
        %1181 = vmatprep.subr.bf16.mxu0 0
        %1182 = vmatpush1.bf16.msra.mxu0 0
        %1183 = vmatprep.subr.bf16.mxu0 0
        %1184 = vmatpush1.bf16.msra.mxu0 0
        %1185 = vmatprep.subr.bf16.mxu0 0
        %1186 = vmatpush1.bf16.msra.mxu0 0
        %1187 = vmatprep.subr.bf16.mxu0 0
        %1188 = vmatpush1.bf16.msra.mxu0 0
        %1189 = vmatprep.subr.bf16.mxu0 0
        %1190 = vmatpush1.bf16.msra.mxu0 0
        %1191 = vmatprep.subr.bf16.mxu0 0
        %1192 = vmatpush1.bf16.msra.mxu0 0
        %1193 = vmatprep.subr.bf16.mxu0 0
        %1194 = vmatpush1.bf16.msra.mxu0 0
        %1195 = vmatprep.subr.bf16.mxu0 0
        %1196 = vmatpush1.bf16.msra.mxu0 0
        %1197 = vmatprep.subr.bf16.mxu0 0
        %1198 = vmatpush1.bf16.msra.mxu0 0
        %1199 = vmatprep.subr.bf16.mxu0 0
        %1200 = vmatpush1.bf16.msra.mxu0 0
        %1201 = vmatprep.subr.bf16.mxu0 0
        %1202 = vmatpush1.bf16.msra.mxu0 0
        %1203 = vmatprep.mubr.bf16.mxu0 0
        %1204 = vmatmul.mubr.bf16.gmra.mrb[0].mxu0 %v1009
        %v1205 = vpop.f32.mrb[0].mxu0
        %v1206 = vadd.f32 0.0, %v1205
        %v1207 = vpop.f32.mrb[0].mxu0
        %v1208 = vpop.f32.mrb[0].mxu0
        %v1209 = vadd.f32 0.0, %v1208
        %v1210 = vpop.f32.mrb[0].mxu0
        %1211 = vmatprep.mubr.bf16.mxu0 0
        %1212 = vmatmul.mubr.bf16.gmra.mrb[0].mxu0 %v1012
        %v1213 = vpop.f32.mrb[0].mxu0
        %v1214 = vadd.f32 0.0, %v1213
        %v1215 = vpop.f32.mrb[0].mxu0
        %v1216 = vpop.f32.mrb[0].mxu0
        %v1217 = vadd.f32 0.0, %v1216
        %v1218 = vpop.f32.mrb[0].mxu0
        %1219 = vmatprep.mubr.bf16.mxu0 0
        %1220 = vmatmul.mubr.bf16.gmra.mrb[0].mxu0 %v1015
        %v1221 = vpop.f32.mrb[0].mxu0
        %v1222 = vadd.f32 0.0, %v1221
        %v1223 = vpop.f32.mrb[0].mxu0
        %v1224 = vpop.f32.mrb[0].mxu0
        %v1225 = vadd.f32 0.0, %v1224
        %v1226 = vpop.f32.mrb[0].mxu0
        %1227 = vmatprep.mubr.bf16.mxu0 0
        %1228 = vmatmul.mubr.bf16.gmra.mrb[0].mxu0 %v1018
        %v1229 = vpop.f32.mrb[0].mxu0
        %v1230 = vadd.f32 0.0, %v1229
        %v1231 = vpop.f32.mrb[0].mxu0
        %v1232 = vpop.f32.mrb[0].mxu0
        %v1233 = vadd.f32 0.0, %v1232
        %v1234 = vpop.f32.mrb[0].mxu0
        %1235 = vmatprep.mubr.bf16.mxu0 0
        %1236 = vmatmul.mubr.bf16.gmra.mrb[0].mxu0 %v1021
        %v1237 = vpop.f32.mrb[0].mxu0
        %v1238 = vadd.f32 0.0, %v1237
        %v1239 = vpop.f32.mrb[0].mxu0
        %v1240 = vpop.f32.mrb[0].mxu0
        %v1241 = vadd.f32 0.0, %v1240
        %v1242 = vpop.f32.mrb[0].mxu0
        %1243 = vmatprep.mubr.bf16.mxu0 0
        %1244 = vmatmul.mubr.bf16.gmra.mrb[0].mxu0 %v1024
        %v1245 = vpop.f32.mrb[0].mxu0
        %v1246 = vadd.f32 0.0, %v1245
        %v1247 = vpop.f32.mrb[0].mxu0
        %v1248 = vpop.f32.mrb[0].mxu0
        %v1249 = vadd.f32 0.0, %v1248
        %v1250 = vpop.f32.mrb[0].mxu0
        %1251 = vmatprep.mubr.bf16.mxu0 0
        %1252 = vmatmul.mubr.bf16.gmra.mrb[0].mxu0 %v1027
        %v1253 = vpop.f32.mrb[0].mxu0
        %v1254 = vadd.f32 0.0, %v1253
        %v1255 = vpop.f32.mrb[0].mxu0
        %v1256 = vpop.f32.mrb[0].mxu0
        %v1257 = vadd.f32 0.0, %v1256
        %v1258 = vpop.f32.mrb[0].mxu0
        %1259 = vmatprep.mubr.bf16.mxu0 0
        %1260 = vmatmul.mubr.bf16.gmra.mrb[0].mxu0 %v1030
        %v1261 = vpop.f32.mrb[0].mxu0
        %v1262 = vadd.f32 0.0, %v1261
        %v1263 = vpop.f32.mrb[0].mxu0
        %v1264 = vpop.f32.mrb[0].mxu0
        %v1265 = vadd.f32 0.0, %v1264
        %v1266 = vpop.f32.mrb[0].mxu0
        %1267 = vmatprep.mubr.bf16.mxu0 0
        %1268 = vmatmul.mubr.bf16.gmra.mrb[0].mxu0 %v1033
        %v1269 = vpop.f32.mrb[0].mxu0
        %v1270 = vadd.f32 0.0, %v1269
        %v1271 = vpop.f32.mrb[0].mxu0
        %v1272 = vpop.f32.mrb[0].mxu0
        %v1273 = vadd.f32 0.0, %v1272
        %v1274 = vpop.f32.mrb[0].mxu0
        %1275 = vmatprep.mubr.bf16.mxu0 0
        %1276 = vmatmul.mubr.bf16.gmra.mrb[0].mxu0 %v1036
        %v1277 = vpop.f32.mrb[0].mxu0
        %v1278 = vadd.f32 0.0, %v1277
        %v1279 = vpop.f32.mrb[0].mxu0
        %v1280 = vpop.f32.mrb[0].mxu0
        %v1281 = vadd.f32 0.0, %v1280
        %v1282 = vpop.f32.mrb[0].mxu0
        %1283 = vmatprep.mubr.bf16.mxu0 0
        %1284 = vmatmul.mubr.bf16.gmra.mrb[0].mxu0 %v1039
        %v1285 = vpop.f32.mrb[0].mxu0
        %v1286 = vadd.f32 0.0, %v1285
        %v1287 = vpop.f32.mrb[0].mxu0
        %v1288 = vpop.f32.mrb[0].mxu0
        %v1289 = vadd.f32 0.0, %v1288
        %v1290 = vpop.f32.mrb[0].mxu0
        %1291 = vmatprep.mubr.bf16.mxu0 0
        %1292 = vmatmul.mubr.bf16.gmra.mrb[0].mxu0 %v1042
        %v1293 = vpop.f32.mrb[0].mxu0
        %v1294 = vadd.f32 0.0, %v1293
        %v1295 = vpop.f32.mrb[0].mxu0
        %v1296 = vpop.f32.mrb[0].mxu0
        %v1297 = vadd.f32 0.0, %v1296
        %v1298 = vpop.f32.mrb[0].mxu0
        %1299 = vmatprep.mubr.bf16.mxu0 0
        %1300 = vmatmul.mubr.bf16.gmra.mrb[0].mxu0 %v1045
        %v1301 = vpop.f32.mrb[0].mxu0
        %v1302 = vadd.f32 0.0, %v1301
        %v1303 = vpop.f32.mrb[0].mxu0
        %v1304 = vpop.f32.mrb[0].mxu0
        %v1305 = vadd.f32 0.0, %v1304
        %v1306 = vpop.f32.mrb[0].mxu0
        %1307 = vmatprep.mubr.bf16.mxu0 0
        %1308 = vmatmul.mubr.bf16.gmra.mrb[0].mxu0 %v1048
        %v1309 = vpop.f32.mrb[0].mxu0
        %v1310 = vadd.f32 0.0, %v1309
        %v1311 = vpop.f32.mrb[0].mxu0
        %v1312 = vpop.f32.mrb[0].mxu0
        %v1313 = vadd.f32 0.0, %v1312
        %v1314 = vpop.f32.mrb[0].mxu0
        %1315 = vmatprep.mubr.bf16.mxu0 0
        %1316 = vmatmul.mubr.bf16.gmra.mrb[0].mxu0 %v1051
        %v1317 = vpop.f32.mrb[0].mxu0
        %v1318 = vadd.f32 0.0, %v1317
        %v1319 = vpop.f32.mrb[0].mxu0
        %v1320 = vpop.f32.mrb[0].mxu0
        %v1321 = vadd.f32 0.0, %v1320
        %v1322 = vpop.f32.mrb[0].mxu0
        %1323 = vmatprep.mubr.bf16.mxu0 0
        %1324 = vmatmul.mubr.bf16.gmra.mrb[0].mxu0 %v1054
        %v1325 = vpop.f32.mrb[0].mxu0
        %v1326 = vadd.f32 0.0, %v1325
        %v1327 = vpop.f32.mrb[0].mxu0
        %v1328 = vpop.f32.mrb[0].mxu0
        %v1329 = vadd.f32 0.0, %v1328
        %v1330 = vpop.f32.mrb[0].mxu0
        %1331 = vmatprep.mubr.bf16.mxu0 0
        %1332 = vmatmul.mubr.bf16.gmra.mrb[0].mxu0 %v1057
        %v1333 = vpop.f32.mrb[0].mxu0
        %v1334 = vadd.f32 0.0, %v1333
        %v1335 = vpop.f32.mrb[0].mxu0
        %v1336 = vpop.f32.mrb[0].mxu0
        %v1337 = vadd.f32 0.0, %v1336
        %v1338 = vpop.f32.mrb[0].mxu0
        %1339 = vmatprep.mubr.bf16.mxu0 0
        %1340 = vmatmul.mubr.bf16.gmra.mrb[0].mxu0 %v1060
        %v1341 = vpop.f32.mrb[0].mxu0
        %v1342 = vadd.f32 0.0, %v1341
        %v1343 = vpop.f32.mrb[0].mxu0
        %v1344 = vpop.f32.mrb[0].mxu0
        %v1345 = vadd.f32 0.0, %v1344
        %v1346 = vpop.f32.mrb[0].mxu0
        %1347 = vmatprep.mubr.bf16.mxu0 0
        %1348 = vmatmul.mubr.bf16.gmra.mrb[0].mxu0 %v1063
        %v1349 = vpop.f32.mrb[0].mxu0
        %v1350 = vadd.f32 0.0, %v1349
        %v1351 = vpop.f32.mrb[0].mxu0
        %v1352 = vpop.f32.mrb[0].mxu0
        %v1353 = vadd.f32 0.0, %v1352
        %v1354 = vpop.f32.mrb[0].mxu0
        %1355 = vmatprep.mubr.bf16.mxu0 0
        %1356 = vmatmul.mubr.bf16.gmra.mrb[0].mxu0 %v1066
        %v1357 = vpop.f32.mrb[0].mxu0
        %v1358 = vadd.f32 0.0, %v1357
        %v1359 = vpop.f32.mrb[0].mxu0
        %v1360 = vpop.f32.mrb[0].mxu0
        %v1361 = vadd.f32 0.0, %v1360
        %v1362 = vpop.f32.mrb[0].mxu0
        %1363 = vmatprep.mubr.bf16.mxu0 0
        %1364 = vmatmul.mubr.bf16.gmra.mrb[0].mxu0 %v1069
        %v1365 = vpop.f32.mrb[0].mxu0
        %v1366 = vadd.f32 0.0, %v1365
        %v1367 = vpop.f32.mrb[0].mxu0
        %v1368 = vpop.f32.mrb[0].mxu0
        %v1369 = vadd.f32 0.0, %v1368
        %v1370 = vpop.f32.mrb[0].mxu0
        %1371 = vmatprep.mubr.bf16.mxu0 0
        %1372 = vmatmul.mubr.bf16.gmra.mrb[0].mxu0 %v1072
        %v1373 = vpop.f32.mrb[0].mxu0
        %v1374 = vadd.f32 0.0, %v1373
        %v1375 = vpop.f32.mrb[0].mxu0
        %v1376 = vpop.f32.mrb[0].mxu0
        %v1377 = vadd.f32 0.0, %v1376
        %v1378 = vpop.f32.mrb[0].mxu0
        %1379 = vmatprep.mubr.bf16.mxu0 0
        %1380 = vmatmul.mubr.bf16.gmra.mrb[0].mxu0 %v1075
        %v1381 = vpop.f32.mrb[0].mxu0
        %v1382 = vadd.f32 0.0, %v1381
        %v1383 = vpop.f32.mrb[0].mxu0
        %v1384 = vpop.f32.mrb[0].mxu0
        %v1385 = vadd.f32 0.0, %v1384
        %v1386 = vpop.f32.mrb[0].mxu0
        %1387 = vmatprep.mubr.bf16.mxu0 0
        %1388 = vmatmul.mubr.bf16.gmra.mrb[0].mxu0 %v1078
        %v1389 = vpop.f32.mrb[0].mxu0
        %v1390 = vadd.f32 0.0, %v1389
        %v1391 = vpop.f32.mrb[0].mxu0
        %v1392 = vpop.f32.mrb[0].mxu0
        %v1393 = vadd.f32 0.0, %v1392
        %v1394 = vpop.f32.mrb[0].mxu0
        %1395 = vmatprep.mubr.bf16.mxu0 0
        %1396 = vmatmul.mubr.bf16.gmra.mrb[0].mxu0 %v1081
        %v1397 = vpop.f32.mrb[0].mxu0
        %v1398 = vadd.f32 0.0, %v1397
        %v1399 = vpop.f32.mrb[0].mxu0
        %v1400 = vpop.f32.mrb[0].mxu0
        %v1401 = vadd.f32 0.0, %v1400
        %v1402 = vpop.f32.mrb[0].mxu0
        %1403 = vmatprep.mubr.bf16.mxu0 0
        %1404 = vmatmul.mubr.bf16.gmra.mrb[0].mxu0 %v1084
        %v1405 = vpop.f32.mrb[0].mxu0
        %v1406 = vadd.f32 0.0, %v1405
        %v1407 = vpop.f32.mrb[0].mxu0
        %v1408 = vpop.f32.mrb[0].mxu0
        %v1409 = vadd.f32 0.0, %v1408
        %v1410 = vpop.f32.mrb[0].mxu0
        %1411 = vmatprep.mubr.bf16.mxu0 0
        %1412 = vmatmul.mubr.bf16.gmra.mrb[0].mxu0 %v1087
        %v1413 = vpop.f32.mrb[0].mxu0
        %v1414 = vadd.f32 0.0, %v1413
        %v1415 = vpop.f32.mrb[0].mxu0
        %v1416 = vpop.f32.mrb[0].mxu0
        %v1417 = vadd.f32 0.0, %v1416
        %v1418 = vpop.f32.mrb[0].mxu0
        %1419 = vmatprep.mubr.bf16.mxu0 0
        %1420 = vmatmul.mubr.bf16.gmra.mrb[0].mxu0 %v1090
        %v1421 = vpop.f32.mrb[0].mxu0
        %v1422 = vadd.f32 0.0, %v1421
        %v1423 = vpop.f32.mrb[0].mxu0
        %v1424 = vpop.f32.mrb[0].mxu0
        %v1425 = vadd.f32 0.0, %v1424
        %v1426 = vpop.f32.mrb[0].mxu0
        %1427 = vmatprep.mubr.bf16.mxu0 0
        %1428 = vmatmul.mubr.bf16.gmra.mrb[0].mxu0 %v1093
        %v1429 = vpop.f32.mrb[0].mxu0
        %v1430 = vadd.f32 0.0, %v1429
        %v1431 = vpop.f32.mrb[0].mxu0
        %v1432 = vpop.f32.mrb[0].mxu0
        %v1433 = vadd.f32 0.0, %v1432
        %v1434 = vpop.f32.mrb[0].mxu0
        %1435 = vmatprep.mubr.bf16.mxu0 0
        %1436 = vmatmul.mubr.bf16.gmra.mrb[0].mxu0 %v1096
        %v1437 = vpop.f32.mrb[0].mxu0
        %v1438 = vadd.f32 0.0, %v1437
        %v1439 = vpop.f32.mrb[0].mxu0
        %v1440 = vpop.f32.mrb[0].mxu0
        %v1441 = vadd.f32 0.0, %v1440
        %v1442 = vpop.f32.mrb[0].mxu0
        %1443 = vmatprep.mubr.bf16.mxu0 0
        %1444 = vmatmul.mubr.bf16.gmra.mrb[0].mxu0 %v1099
        %v1445 = vpop.f32.mrb[0].mxu0
        %v1446 = vadd.f32 0.0, %v1445
        %v1447 = vpop.f32.mrb[0].mxu0
        %v1448 = vpop.f32.mrb[0].mxu0
        %v1449 = vadd.f32 0.0, %v1448
        %v1450 = vpop.f32.mrb[0].mxu0
        %1451 = vmatprep.mubr.bf16.mxu0 0
        %1452 = vmatmul.mubr.bf16.gmra.mrb[0].mxu0 %v1102
        %v1453 = vpop.f32.mrb[0].mxu0
        %v1454 = vadd.f32 0.0, %v1453
        %v1455 = vpop.f32.mrb[0].mxu0
        %v1456 = vpop.f32.mrb[0].mxu0
        %v1457 = vadd.f32 0.0, %v1456
        %v1458 = vpop.f32.mrb[0].mxu0
        %1459 = vmatprep.mubr.bf16.mxu0 0
        %1460 = vmatmul.mubr.bf16.gmra.mrb[0].mxu0 %v1105
        %v1461 = vpop.f32.mrb[0].mxu0
        %v1462 = vadd.f32 0.0, %v1461
        %v1463 = vpop.f32.mrb[0].mxu0
        %v1464 = vpop.f32.mrb[0].mxu0
        %v1465 = vadd.f32 0.0, %v1464
        %v1466 = vpop.f32.mrb[0].mxu0
        %1467 = vmatprep.mubr.bf16.mxu0 0
        %1468 = vmatmul.mubr.bf16.gmra.mrb[0].mxu0 %v1108
        %v1469 = vpop.f32.mrb[0].mxu0
        %v1470 = vadd.f32 0.0, %v1469
        %v1471 = vpop.f32.mrb[0].mxu0
        %v1472 = vpop.f32.mrb[0].mxu0
        %v1473 = vadd.f32 0.0, %v1472
        %v1474 = vpop.f32.mrb[0].mxu0
        %1475 = vmatprep.mubr.bf16.mxu0 0
        %1476 = vmatmul.mubr.bf16.gmra.mrb[0].mxu0 %v1111
        %v1477 = vpop.f32.mrb[0].mxu0
        %v1478 = vadd.f32 0.0, %v1477
        %v1479 = vpop.f32.mrb[0].mxu0
        %v1480 = vpop.f32.mrb[0].mxu0
        %v1481 = vadd.f32 0.0, %v1480
        %v1482 = vpop.f32.mrb[0].mxu0
        %1483 = vmatprep.mubr.bf16.mxu0 0
        %1484 = vmatmul.mubr.bf16.gmra.mrb[0].mxu0 %v1114
        %v1485 = vpop.f32.mrb[0].mxu0
        %v1486 = vadd.f32 0.0, %v1485
        %v1487 = vpop.f32.mrb[0].mxu0
        %v1488 = vpop.f32.mrb[0].mxu0
        %v1489 = vadd.f32 0.0, %v1488
        %v1490 = vpop.f32.mrb[0].mxu0
        %1491 = vmatprep.mubr.bf16.mxu0 0
        %1492 = vmatmul.mubr.bf16.gmra.mrb[0].mxu0 %v1117
        %v1493 = vpop.f32.mrb[0].mxu0
        %v1494 = vadd.f32 0.0, %v1493
        %v1495 = vpop.f32.mrb[0].mxu0
        %v1496 = vpop.f32.mrb[0].mxu0
        %v1497 = vadd.f32 0.0, %v1496
        %v1498 = vpop.f32.mrb[0].mxu0
        %1499 = vmatprep.mubr.bf16.mxu0 0
        %1500 = vmatmul.mubr.bf16.gmra.mrb[0].mxu0 %v1120
        %v1501 = vpop.f32.mrb[0].mxu0
        %v1502 = vadd.f32 0.0, %v1501
        %v1503 = vpop.f32.mrb[0].mxu0
        %v1504 = vpop.f32.mrb[0].mxu0
        %v1505 = vadd.f32 0.0, %v1504
        %v1506 = vpop.f32.mrb[0].mxu0
        %1507 = vmatprep.mubr.bf16.mxu0 0
        %1508 = vmatmul.mubr.bf16.gmra.mrb[0].mxu0 %v1123
        %v1509 = vpop.f32.mrb[0].mxu0
        %v1510 = vadd.f32 0.0, %v1509
        %v1511 = vpop.f32.mrb[0].mxu0
        %v1512 = vpop.f32.mrb[0].mxu0
        %v1513 = vadd.f32 0.0, %v1512
        %v1514 = vpop.f32.mrb[0].mxu0
        %1515 = vmatprep.mubr.bf16.mxu0 0
        %1516 = vmatmul.mubr.bf16.gmra.mrb[0].mxu0 %v1126
        %v1517 = vpop.f32.mrb[0].mxu0
        %v1518 = vadd.f32 0.0, %v1517
        %v1519 = vpop.f32.mrb[0].mxu0
        %v1520 = vpop.f32.mrb[0].mxu0
        %v1521 = vadd.f32 0.0, %v1520
        %v1522 = vpop.f32.mrb[0].mxu0
        %1523 = vmatprep.mubr.bf16.mxu0 0
        %1524 = vmatmul.mubr.bf16.gmra.mrb[0].mxu0 %v1129
        %v1525 = vpop.f32.mrb[0].mxu0
        %v1526 = vadd.f32 0.0, %v1525
        %v1527 = vpop.f32.mrb[0].mxu0
        %v1528 = vpop.f32.mrb[0].mxu0
        %v1529 = vadd.f32 0.0, %v1528
        %v1530 = vpop.f32.mrb[0].mxu0
        %1531 = vmatprep.mubr.bf16.mxu0 0
        %1532 = vmatmul.mubr.bf16.gmra.mrb[0].mxu0 %v1132
        %v1533 = vpop.f32.mrb[0].mxu0
        %v1534 = vadd.f32 0.0, %v1533
        %v1535 = vpop.f32.mrb[0].mxu0
        %v1536 = vpop.f32.mrb[0].mxu0
        %v1537 = vadd.f32 0.0, %v1536
        %v1538 = vpop.f32.mrb[0].mxu0
        %1539 = vmatprep.mubr.bf16.mxu0 0
        %1540 = vmatmul.mubr.bf16.gmra.mrb[0].mxu0 %v1135
        %v1541 = vpop.f32.mrb[0].mxu0
        %v1542 = vadd.f32 0.0, %v1541
        %v1543 = vpop.f32.mrb[0].mxu0
        %v1544 = vpop.f32.mrb[0].mxu0
        %v1545 = vadd.f32 0.0, %v1544
        %v1546 = vpop.f32.mrb[0].mxu0
        %1547 = vmatprep.mubr.bf16.mxu0 0
        %1548 = vmatmul.mubr.bf16.gmra.mrb[0].mxu0 %v1138
        %v1549 = vpop.f32.mrb[0].mxu0
        %v1550 = vadd.f32 0.0, %v1549
        %v1551 = vpop.f32.mrb[0].mxu0
        %v1552 = vpop.f32.mrb[0].mxu0
        %v1553 = vadd.f32 0.0, %v1552
        %v1554 = vpop.f32.mrb[0].mxu0
        %1555 = vmatprep.mubr.bf16.mxu0 0
        %1556 = vmatmul.mubr.bf16.gmra.mrb[0].mxu0 %v1141
        %v1557 = vpop.f32.mrb[0].mxu0
        %v1558 = vadd.f32 0.0, %v1557
        %v1559 = vpop.f32.mrb[0].mxu0
        %v1560 = vpop.f32.mrb[0].mxu0
        %v1561 = vadd.f32 0.0, %v1560
        %v1562 = vpop.f32.mrb[0].mxu0
        %1563 = vmatprep.mubr.bf16.mxu0 0
        %1564 = vmatmul.mubr.bf16.gmra.mrb[0].mxu0 %v1144
        %v1565 = vpop.f32.mrb[0].mxu0
        %v1566 = vadd.f32 0.0, %v1565
        %v1567 = vpop.f32.mrb[0].mxu0
        %v1568 = vpop.f32.mrb[0].mxu0
        %v1569 = vadd.f32 0.0, %v1568
        %v1570 = vpop.f32.mrb[0].mxu0
        %1571 = vmatprep.mubr.bf16.mxu0 0
        %1572 = vmatmul.mubr.bf16.gmra.mrb[0].mxu0 %v1147
        %v1573 = vpop.f32.mrb[0].mxu0
        %v1574 = vadd.f32 0.0, %v1573
        %v1575 = vpop.f32.mrb[0].mxu0
        %v1576 = vpop.f32.mrb[0].mxu0
        %v1577 = vadd.f32 0.0, %v1576
        %v1578 = vpop.f32.mrb[0].mxu0
        %1579 = vmatprep.mubr.bf16.mxu0 0
        %1580 = vmatmul.mubr.bf16.gmra.mrb[0].mxu0 %v1150
        %v1581 = vpop.f32.mrb[0].mxu0
        %v1582 = vadd.f32 0.0, %v1581
        %v1583 = vpop.f32.mrb[0].mxu0
        %v1584 = vpop.f32.mrb[0].mxu0
        %v1585 = vadd.f32 0.0, %v1584
        %v1586 = vpop.f32.mrb[0].mxu0
        %1587 = vmatprep.mubr.bf16.mxu0 0
        %1588 = vmatmul.mubr.bf16.gmra.mrb[0].mxu0 %v1153
        %v1589 = vpop.f32.mrb[0].mxu0
        %v1590 = vadd.f32 0.0, %v1589
        %v1591 = vpop.f32.mrb[0].mxu0
        %v1592 = vpop.f32.mrb[0].mxu0
        %v1593 = vadd.f32 0.0, %v1592
        %v1594 = vpop.f32.mrb[0].mxu0
        %1595 = vmatprep.mubr.bf16.mxu0 0
        %1596 = vmatmul.mubr.bf16.gmra.mrb[0].mxu0 %v1156
        %v1597 = vpop.f32.mrb[0].mxu0
        %v1598 = vadd.f32 0.0, %v1597
        %v1599 = vpop.f32.mrb[0].mxu0
        %v1600 = vpop.f32.mrb[0].mxu0
        %v1601 = vadd.f32 0.0, %v1600
        %v1602 = vpop.f32.mrb[0].mxu0
        %1603 = vmatprep.mubr.bf16.mxu0 0
        %1604 = vmatmul.mubr.bf16.gmra.mrb[0].mxu0 %v1159
        %v1605 = vpop.f32.mrb[0].mxu0
        %v1606 = vadd.f32 0.0, %v1605
        %v1607 = vpop.f32.mrb[0].mxu0
        %v1608 = vpop.f32.mrb[0].mxu0
        %v1609 = vadd.f32 0.0, %v1608
        %v1610 = vpop.f32.mrb[0].mxu0
        %1611 = vmatprep.mubr.bf16.mxu0 0
        %1612 = vmatmul.mubr.bf16.gmra.mrb[0].mxu0 %v1162
        %v1613 = vpop.f32.mrb[0].mxu0
        %v1614 = vadd.f32 0.0, %v1613
        %v1615 = vpop.f32.mrb[0].mxu0
        %v1616 = vpop.f32.mrb[0].mxu0
        %v1617 = vadd.f32 0.0, %v1616
        %v1618 = vpop.f32.mrb[0].mxu0
        %1619 = vdwg.mxu0
        %v1620 = vmax.f32 %v1206, %v1310
        %v1621 = vmax.f32 %v1209, %v1313
        %v1622 = vmax.f32 %v1214, %v1318
        %v1623 = vmax.f32 %v1217, %v1321
        %v1624 = vmax.f32 %v1222, %v1326
        %v1625 = vmax.f32 %v1225, %v1329
        %v1626 = vmax.f32 %v1230, %v1334
        %v1627 = vmax.f32 %v1233, %v1337
        %v1628 = vmax.f32 %v1238, %v1342
        %v1629 = vmax.f32 %v1241, %v1345
        %v1630 = vmax.f32 %v1246, %v1350
        %v1631 = vmax.f32 %v1249, %v1353
        %v1632 = vmax.f32 %v1254, %v1358
        %v1633 = vmax.f32 %v1257, %v1361
        %v1634 = vmax.f32 %v1262, %v1366
        %v1635 = vmax.f32 %v1265, %v1369
        %v1636 = vmax.f32 %v1270, %v1374
        %v1637 = vmax.f32 %v1273, %v1377
        %v1638 = vmax.f32 %v1278, %v1382
        %v1639 = vmax.f32 %v1281, %v1385
        %v1640 = vmax.f32 %v1286, %v1390
        %v1641 = vmax.f32 %v1289, %v1393
        %v1642 = vmax.f32 %v1294, %v1398
        %v1643 = vmax.f32 %v1297, %v1401
        %v1644 = vmax.f32 %v1302, %v1406
        %v1645 = vmax.f32 %v1305, %v1409
        %v1646 = vmax.f32 %v1620, %v1414
        %v1647 = vmax.f32 %v1621, %v1417
        %v1648 = vmax.f32 %v1622, %v1422
        %v1649 = vmax.f32 %v1623, %v1425
        %v1650 = vmax.f32 %v1624, %v1430
        %v1651 = vmax.f32 %v1625, %v1433
        %v1652 = vmax.f32 %v1626, %v1438
        %v1653 = vmax.f32 %v1627, %v1441
        %v1654 = vmax.f32 %v1628, %v1446
        %v1655 = vmax.f32 %v1629, %v1449
        %v1656 = vmax.f32 %v1630, %v1454
        %v1657 = vmax.f32 %v1631, %v1457
        %v1658 = vmax.f32 %v1632, %v1462
        %v1659 = vmax.f32 %v1633, %v1465
        %v1660 = vmax.f32 %v1634, %v1470
        %v1661 = vmax.f32 %v1635, %v1473
        %v1662 = vmax.f32 %v1636, %v1478
        %v1663 = vmax.f32 %v1637, %v1481
        %v1664 = vmax.f32 %v1638, %v1486
        %v1665 = vmax.f32 %v1639, %v1489
        %v1666 = vmax.f32 %v1640, %v1494
        %v1667 = vmax.f32 %v1641, %v1497
        %v1668 = vmax.f32 %v1642, %v1502
        %v1669 = vmax.f32 %v1643, %v1505
        %v1670 = vmax.f32 %v1644, %v1510
        %v1671 = vmax.f32 %v1645, %v1513
        %v1672 = vmax.f32 %v1646, %v1518
        %v1673 = vmax.f32 %v1647, %v1521
        %v1674 = vmax.f32 %v1648, %v1526
        %v1675 = vmax.f32 %v1649, %v1529
        %v1676 = vmax.f32 %v1650, %v1534
        %v1677 = vmax.f32 %v1651, %v1537
        %v1678 = vmax.f32 %v1652, %v1542
        %v1679 = vmax.f32 %v1653, %v1545
        %v1680 = vmax.f32 %v1654, %v1550
        %v1681 = vmax.f32 %v1655, %v1553
        %v1682 = vmax.f32 %v1656, %v1558
        %v1683 = vmax.f32 %v1657, %v1561
        %v1684 = vmax.f32 %v1658, %v1566
        %v1685 = vmax.f32 %v1659, %v1569
        %v1686 = vmax.f32 %v1660, %v1574
        %v1687 = vmax.f32 %v1661, %v1577
        %v1688 = vmax.f32 %v1662, %v1582
        %v1689 = vmax.f32 %v1663, %v1585
        %v1690 = vmax.f32 %v1664, %v1590
        %v1691 = vmax.f32 %v1665, %v1593
        %v1692 = vmax.f32 %v1666, %v1598
        %v1693 = vmax.f32 %v1667, %v1601
        %v1694 = vmax.f32 %v1668, %v1606
        %v1695 = vmax.f32 %v1669, %v1609
        %v1696 = vmax.f32 %v1670, %v1614
        %v1697 = vmax.f32 %v1671, %v1617
        %v1698 = vld [vmem:[%s2] sm:$0x1]
        %v1700 = vlaneseq
        %v1701 = vshrl.u32 %v1700, 7
        %v1702 = vsub.s32 0, %v1701
        %v1703 = vrot.slane %v1698, %v1702
        %v1705 = vadd.f32 %v1672, %v1703
        %v1706 = vadd.f32 %v1673, %v1703
        %v1707 = vadd.f32 %v1674, %v1703
        %v1708 = vadd.f32 %v1675, %v1703
        %v1709 = vadd.f32 %v1676, %v1703
        %v1710 = vadd.f32 %v1677, %v1703
        %v1711 = vadd.f32 %v1678, %v1703
        %v1712 = vadd.f32 %v1679, %v1703
        %v1713 = vadd.f32 %v1680, %v1703
        %v1714 = vadd.f32 %v1681, %v1703
        %v1715 = vadd.f32 %v1682, %v1703
        %v1716 = vadd.f32 %v1683, %v1703
        %v1717 = vadd.f32 %v1684, %v1703
        %v1718 = vadd.f32 %v1685, %v1703
        %v1719 = vadd.f32 %v1686, %v1703
        %v1720 = vadd.f32 %v1687, %v1703
        %v1721 = vadd.f32 %v1688, %v1703
        %v1722 = vadd.f32 %v1689, %v1703
        %v1723 = vadd.f32 %v1690, %v1703
        %v1724 = vadd.f32 %v1691, %v1703
        %v1725 = vadd.f32 %v1692, %v1703
        %v1726 = vadd.f32 %v1693, %v1703
        %v1727 = vadd.f32 %v1694, %v1703
        %v1728 = vadd.f32 %v1695, %v1703
        %v1729 = vadd.f32 %v1696, %v1703
        %v1730 = vadd.f32 %v1697, %v1703
        %v1731 = vmax.f32 %v1705, 0.0
        %v1732 = vmax.f32 %v1706, 0.0
        %v1733 = vmax.f32 %v1707, 0.0
        %v1734 = vmax.f32 %v1708, 0.0
        %v1735 = vmax.f32 %v1709, 0.0
        %v1736 = vmax.f32 %v1710, 0.0
        %v1737 = vmax.f32 %v1711, 0.0
        %v1738 = vmax.f32 %v1712, 0.0
        %v1739 = vmax.f32 %v1713, 0.0
        %v1740 = vmax.f32 %v1714, 0.0
        %v1741 = vmax.f32 %v1715, 0.0
        %v1742 = vmax.f32 %v1716, 0.0
        %v1743 = vmax.f32 %v1717, 0.0
        %v1744 = vmax.f32 %v1718, 0.0
        %v1745 = vmax.f32 %v1719, 0.0
        %v1746 = vmax.f32 %v1720, 0.0
        %v1747 = vmax.f32 %v1721, 0.0
        %v1748 = vmax.f32 %v1722, 0.0
        %v1749 = vmax.f32 %v1723, 0.0
        %v1750 = vmax.f32 %v1724, 0.0
        %v1751 = vmax.f32 %v1725, 0.0
        %v1752 = vmax.f32 %v1726, 0.0
        %v1753 = vmax.f32 %v1727, 0.0
        %v1754 = vmax.f32 %v1728, 0.0
        %v1755 = vmax.f32 %v1729, 0.0
        %v1756 = vmax.f32 %v1730, 0.0
        %vm1757 = vcmask 785408
        %1758 = vst.msk [vmem:[%s625] sm:$0xff] %vm1757, %v1731
        %1759 = vst.msk [vmem:[%s625 + $0x8] sm:$0xff] %vm1757, %v1732
        %1760 = vst.msk [vmem:[%s625 + $0x10] sm:$0xff] %vm1757, %v1733
        %1761 = vst.msk [vmem:[%s625 + $0x18] sm:$0xff] %vm1757, %v1734
        %1762 = vst.msk [vmem:[%s625 + $0x20] sm:$0xff] %vm1757, %v1735
        %1763 = vst.msk [vmem:[%s625 + $0x28] sm:$0xff] %vm1757, %v1736
        %1764 = vst.msk [vmem:[%s625 + $0x30] sm:$0xff] %vm1757, %v1737
        %1765 = vst.msk [vmem:[%s625 + $0x38] sm:$0xff] %vm1757, %v1738
        %1766 = vst.msk [vmem:[%s625 + $0x40] sm:$0xff] %vm1757, %v1739
        %1767 = vst.msk [vmem:[%s625 + $0x48] sm:$0xff] %vm1757, %v1740
        %1768 = vst.msk [vmem:[%s625 + $0x50] sm:$0xff] %vm1757, %v1741
        %1769 = vst.msk [vmem:[%s625 + $0x58] sm:$0xff] %vm1757, %v1742
        %1770 = vst.msk [vmem:[%s625 + $0x60] sm:$0xff] %vm1757, %v1743
        %1771 = vst.msk [vmem:[%s625 + $0x68] sm:$0xff] %vm1757, %v1744
        %1772 = vst.msk [vmem:[%s625 + $0x70] sm:$0xff] %vm1757, %v1745
        %1773 = vst.msk [vmem:[%s625 + $0x78] sm:$0xff] %vm1757, %v1746
        %1774 = vst.msk [vmem:[%s625 + $0x80] sm:$0xff] %vm1757, %v1747
        %1775 = vst.msk [vmem:[%s625 + $0x88] sm:$0xff] %vm1757, %v1748
        %1776 = vst.msk [vmem:[%s625 + $0x90] sm:$0xff] %vm1757, %v1749
        %1777 = vst.msk [vmem:[%s625 + $0x98] sm:$0xff] %vm1757, %v1750
        %1778 = vst.msk [vmem:[%s625 + $0xa0] sm:$0xff] %vm1757, %v1751
        %1779 = vst.msk [vmem:[%s625 + $0xa8] sm:$0xff] %vm1757, %v1752
        %1780 = vst.msk [vmem:[%s625 + $0xb0] sm:$0xff] %vm1757, %v1753
        %1781 = vst.msk [vmem:[%s625 + $0xb8] sm:$0xff] %vm1757, %v1754
        %1782 = vst.msk [vmem:[%s625 + $0xc0] sm:$0xff] %vm1757, %v1755
        %1783 = vst.msk [vmem:[%s625 + $0xc8] sm:$0xff] %vm1757, %v1756
        %s1784 = smul.u32 26, %s14
        %p1785 = scmp.lt.s32.totalorder %s1784, 51
        %s1786 = scalar_select %p1785, %s1784, 51
        %s1787 = smul.addr %s1786, 8
        %s1788 = scalar_lea.vmem %s3, %s1787
        // Predicated region
        $region74: #{tpu_custom_call.1} parent=68 // pred_check
          %p1789 = pneg %p100
        $region75: #{tpu_custom_call.1} parent=68 // pred_check_branch
          %1791 = sbr.rel (%p1789) target = $region77
        $region76: #{tpu_custom_call.1} parent=68 // pred_region
          %s1792 = smul.u32 26, %s14
        $region77: #{tpu_custom_call.1} parent=68 // pred_fallthru
          _
      $region69: #{tpu_custom_call.1} parent=5 // pred_fallthru
        _
      %p1793 = scmp.le.s32.totalorder 2, %s9
      // Predicated region
      $region78: #{tpu_custom_call.1} parent=5 // pred_check
        %p1794 = pneg %p1793
      $region79: #{tpu_custom_call.1} parent=5 // pred_check_branch
        %1796 = sbr.rel (%p1794) target = $region81
      $region80: #{tpu_custom_call.1} parent=5 // pred_region
        %s1797 = ssub.s32 %s9, 2
        // Predicated region
        $region82: #{tpu_custom_call.1} parent=80 // pred_check
          %p1798 = pneg %p106
        $region83: #{tpu_custom_call.1} parent=80 // pred_check_branch
          %1800 = sbr.rel (%p1798) target = $region85
        $region84: #{tpu_custom_call.1} parent=80 // pred_region
          %s1801 = smul.u32 26, %s15
          %p1802 = scmp.lt.s32.totalorder %s1801, 51
          %s1803 = scalar_select %p1802, %s1801, 51
          %s1804 = smul.addr %s1803, 8
          %s1805 = scalar_lea.vmem %s3, %s1804
        $region85: #{tpu_custom_call.1} parent=80 // pred_fallthru
          _
      $region81: #{tpu_custom_call.1} parent=5 // pred_fallthru
        _
    $region6: #{tpu_custom_call.1} parent=1 // loop_footer
      %s13 = sadd.s32 1, %s9
    $region7: #{tpu_custom_call.1} parent=1 // loop_footer_branch
      %8 = sbr.rel target = $region3
    $region8: #{tpu_custom_call.1} parent=1 // loop_exit
      _

</llo_original>
